<compile_context>
chip_gen: v7x
topology: tpu7x:2x2x1
jax: 0.10.0
libtpu: 0.0.40
codegen_flags: <defaults>
</compile_context>

<pallas_src>
import jax
import jax.numpy as jnp
from jax.experimental import pallas as pl
from jax.experimental.pallas import tpu as pltpu  # noqa: F401  (imported for TPU backend symmetry)

Z_DIM = 2
Y_DIM = 10
HIDDEN = 1024
BN_EPS = 1e-5
LEAKY_SLOPE = 0.2


def pz_y_kernel(y_ref, w1_ref, vec_ref, w2_ref, eps_ref, out_ref):
    """Fused Pz_y forward.

    vec_ref : (4, HIDDEN) packed per-feature vectors
              row 0: BN gamma
              row 1: BN beta
              row 2: b2[:Z_DIM]   (mu bias)      in lanes [0, Z_DIM)
              row 3: b2[Z_DIM:]   (logvar bias)  in lanes [0, Z_DIM)
    w2_ref  : (2, HIDDEN, Z_DIM) second linear, split (0: mu cols, 1: logvar cols)
    out_ref : (3, B, Z_DIM) -> rows: z / mu / logvar
    """
    # ---- Linear 1 (b1 omitted: it cancels under the BN mean subtraction) ----
    h = jnp.dot(y_ref[...], w1_ref[...], preferred_element_type=jnp.float32)

    # ---- BatchNorm1d, training mode (batch stats, biased variance) ----------
    mean = jnp.mean(h, axis=0, keepdims=True)
    d = h - mean                                   # centered tensor, computed once
    var = jnp.mean(d * d, axis=0, keepdims=True)
    scale = vec_ref[0:1, :] * jax.lax.rsqrt(var + BN_EPS)   # gamma folded into rsqrt
    h_bn = d * scale + vec_ref[1:2, :]

    # ---- LeakyReLU(0.2) ------------------------------------------------------
    h_act = jnp.where(h_bn >= 0.0, h_bn, LEAKY_SLOPE * h_bn)

    # ---- Linear 2, split weights: mu and logvar both land at lane offset 0 --
    mu = (jnp.dot(h_act, w2_ref[0], preferred_element_type=jnp.float32)
          + vec_ref[2:3, 0:Z_DIM])
    logvar = (jnp.dot(h_act, w2_ref[1], preferred_element_type=jnp.float32)
              + vec_ref[3:4, 0:Z_DIM])

    # ---- Reparameterize (training path) --------------------------------------
    z = eps_ref[...] * jnp.exp(0.5 * logvar) + mu

    # ---- Single coalesced output buffer -> one writeback DMA -----------------
    out_ref[0] = z
    out_ref[1] = mu
    out_ref[2] = logvar


def pz_y_forward(y, params, eps):
    """Run the Pz_y forward pass. Returns (z, mu, logvar)."""
    B = y.shape[0]
    w1, b1, gamma, beta, w2, b2 = params
    del b1  # cancels exactly under training-mode BatchNorm; never reaches the output

    # Pack the small per-feature vectors into one array (one DMA instead of
    # four sublane-padded ones). In a real model this packing is done once at
    # parameter-load time, not per call.
    b2_flat = b2.reshape(2 * Z_DIM)
    vec = jnp.zeros((4, HIDDEN), jnp.float32)
    vec = vec.at[0].set(gamma.reshape(HIDDEN))
    vec = vec.at[1].set(beta.reshape(HIDDEN))
    vec = vec.at[2, :Z_DIM].set(b2_flat[:Z_DIM])
    vec = vec.at[3, :Z_DIM].set(b2_flat[Z_DIM:])

    # Split w2 columns so mu / logvar each sit at lane offset 0 in the kernel.
    w2s = jnp.stack([w2[:, :Z_DIM], w2[:, Z_DIM:]], axis=0)   # (2, HIDDEN, Z_DIM)

    flops = (2 * B * Y_DIM * HIDDEN          # Linear 1
             + 2 * 2 * B * HIDDEN * Z_DIM    # Linear 2 (two narrow dots)
             + 8 * B * HIDDEN)               # BN + LeakyReLU elementwise
    bytes_accessed = 4 * (y.size + w1.size + vec.size + w2s.size + eps.size
                          + 3 * B * Z_DIM)
    cost = pl.CostEstimate(flops=flops,
                           transcendentals=HIDDEN + B * Z_DIM,
                           bytes_accessed=bytes_accessed)

    out = pl.pallas_call(
        pz_y_kernel,
        out_shape=jax.ShapeDtypeStruct((3, B, Z_DIM), jnp.float32),
        cost_estimate=cost,
    )(y, w1, vec, w2s, eps)
    # TODO(synk): for large batches, add a batch-tile grid axis with a two-pass
    # BatchNorm (sum / sum-of-squares accumulation over an 'arbitrary' axis) so
    # the resident hidden tile fits v7x's 64 MiB VMEM and a 'parallel' batch
    # axis can use both v7x TensorCores.
    return out[0], out[1], out[2]


def init_params(key):
    """Deterministic synthetic parameter init (shapes from Pz_y.__init__)."""
    k1, k2, k3, k4 = jax.random.split(key, 4)
    # Linear(Y_DIM, 1024)
    bound1 = 1.0 / jnp.sqrt(Y_DIM)
    w1 = jax.random.uniform(k1, (Y_DIM, HIDDEN), jnp.float32, -bound1, bound1)
    b1 = jax.random.uniform(k2, (1, HIDDEN), jnp.float32, -bound1, bound1)
    # BatchNorm1d(1024): gamma=1, beta=0
    gamma = jnp.ones((1, HIDDEN), jnp.float32)
    beta = jnp.zeros((1, HIDDEN), jnp.float32)
    # Linear(1024, 2*Z_DIM)
    bound2 = 1.0 / jnp.sqrt(HIDDEN)
    w2 = jax.random.uniform(k3, (HIDDEN, 2 * Z_DIM), jnp.float32, -bound2, bound2)
    b2 = jax.random.uniform(k4, (1, 2 * Z_DIM), jnp.float32, -bound2, bound2)
    return (w1, b1, gamma, beta, w2, b2)


def reference_forward(y, params, eps):
    """Pure-JAX reference mirroring the PyTorch forward (training mode)."""
    w1, b1, gamma, beta, w2, b2 = params
    h = y @ w1 + b1
    mean = jnp.mean(h, axis=0, keepdims=True)
    var = jnp.mean((h - mean) ** 2, axis=0, keepdims=True)
    h = (h - mean) / jnp.sqrt(var + BN_EPS) * gamma + beta
    h = jnp.where(h >= 0, h, LEAKY_SLOPE * h)
    x = h @ w2 + b2
    mu, logvar = x[:, :Z_DIM], x[:, Z_DIM:]
    z = eps * jnp.exp(0.5 * logvar) + mu
    return z, mu, logvar


if __name__ == "__main__":
    key = jax.random.PRNGKey(0)
    k_params, k_y, k_eps = jax.random.split(key, 3)

    B = 8  # small batch
    params = init_params(k_params)
    y = jax.random.normal(k_y, (B, Y_DIM), jnp.float32)
    # eps ~ N(0,1): the random draw from PyTorch's reparameterize, supplied
    # from the host so the kernel stays deterministic.
    eps = jax.random.normal(k_eps, (B, Z_DIM), jnp.float32)

    z, mu, logvar = pz_y_forward(y, params, eps)
    jax.block_until_ready((z, mu, logvar))

    z_ref, mu_ref, lv_ref = reference_forward(y, params, eps)
    assert jnp.allclose(z, z_ref, atol=1e-4, rtol=1e-4)
    assert jnp.allclose(mu, mu_ref, atol=1e-4, rtol=1e-4)
    assert jnp.allclose(logvar, lv_ref, atol=1e-4, rtol=1e-4)

    print("KERNEL_OK")
</pallas_src>

<mosaic_0001>
module attributes {stable_mosaic.version = 11 : i64} {
  func.func @pz_y_kernel(%arg0: memref<8x10xf32, #tpu.memory_space<vmem>>, %arg1: memref<10x1024xf32, #tpu.memory_space<vmem>>, %arg2: memref<4x1024xf32, #tpu.memory_space<vmem>>, %arg3: memref<2x1024x2xf32, #tpu.memory_space<vmem>>, %arg4: memref<8x2xf32, #tpu.memory_space<vmem>>, %arg5: memref<3x8x2xf32, #tpu.memory_space<vmem>>) attributes {dimension_semantics = [], scalar_prefetch = 0 : i64, scratch_operands = 0 : i64, tpu.core_type = #tpu.core_type<tc>} {
    %c0 = arith.constant 0 : index
    %c0_0 = arith.constant 0 : index
    %0 = vector.load %arg0[%c0, %c0_0] : memref<8x10xf32, #tpu.memory_space<vmem>>, vector<8x10xf32>
    %c0_1 = arith.constant 0 : index
    %c0_2 = arith.constant 0 : index
    %1 = vector.load %arg1[%c0_1, %c0_2] : memref<10x1024xf32, #tpu.memory_space<vmem>>, vector<10x1024xf32>
    %cst = arith.constant dense<0.000000e+00> : vector<8x1024xf32>
    %2 = tpu.matmul %0, %1, %cst {dimension_numbers = #tpu.dot_dimension_numbers<[1], [0], [0], [1], [0, 0, 1, 1], [], []>} : vector<8x10xf32>, vector<10x1024xf32>, vector<8x1024xf32> -> vector<8x1024xf32>
    %cst_3 = arith.constant dense<0.000000e+00> : vector<1024xf32>
    %3 = vector.multi_reduction <add>, %2, %cst_3 [0] : vector<8x1024xf32> to vector<1024xf32>
    %4 = vector.shape_cast %3 : vector<1024xf32> to vector<1x1024xf32>
    %cst_4 = arith.constant 8.000000e+00 : f32
    %5 = vector.broadcast %cst_4 : f32 to vector<1x1024xf32>
    %6 = arith.divf %4, %5 : vector<1x1024xf32>
    %7 = vector.broadcast %6 : vector<1x1024xf32> to vector<8x1024xf32>
    %8 = arith.subf %2, %7 : vector<8x1024xf32>
    %9 = arith.mulf %8, %8 : vector<8x1024xf32>
    %cst_5 = arith.constant dense<0.000000e+00> : vector<1024xf32>
    %10 = vector.multi_reduction <add>, %9, %cst_5 [0] : vector<8x1024xf32> to vector<1024xf32>
    %11 = vector.shape_cast %10 : vector<1024xf32> to vector<1x1024xf32>
    %cst_6 = arith.constant 8.000000e+00 : f32
    %12 = vector.broadcast %cst_6 : f32 to vector<1x1024xf32>
    %13 = arith.divf %11, %12 : vector<1x1024xf32>
    %c0_7 = arith.constant 0 : index
    %c0_8 = arith.constant 0 : index
    %14 = vector.load %arg2[%c0_7, %c0_8] : memref<4x1024xf32, #tpu.memory_space<vmem>>, vector<1x1024xf32>
    %cst_9 = arith.constant 9.99999974E-6 : f32
    %15 = vector.broadcast %cst_9 : f32 to vector<1x1024xf32>
    %16 = arith.addf %13, %15 : vector<1x1024xf32>
    %17 = math.rsqrt %16 : vector<1x1024xf32>
    %18 = arith.mulf %14, %17 : vector<1x1024xf32>
    %19 = vector.broadcast %18 : vector<1x1024xf32> to vector<8x1024xf32>
    %20 = arith.mulf %8, %19 : vector<8x1024xf32>
    %c1 = arith.constant 1 : index
    %c0_10 = arith.constant 0 : index
    %21 = vector.load %arg2[%c1, %c0_10] : memref<4x1024xf32, #tpu.memory_space<vmem>>, vector<1x1024xf32>
    %22 = vector.broadcast %21 : vector<1x1024xf32> to vector<8x1024xf32>
    %23 = arith.addf %20, %22 : vector<8x1024xf32>
    %cst_11 = arith.constant 0.000000e+00 : f32
    %24 = vector.broadcast %cst_11 : f32 to vector<8x1024xf32>
    %25 = arith.cmpf oge, %23, %24 : vector<8x1024xf32>
    %cst_12 = arith.constant 2.000000e-01 : f32
    %26 = vector.broadcast %cst_12 : f32 to vector<8x1024xf32>
    %27 = arith.mulf %26, %23 : vector<8x1024xf32>
    %28 = arith.select %25, %23, %27 : vector<8x1024xi1>, vector<8x1024xf32>
    %c0_13 = arith.constant 0 : index
    %c0_14 = arith.constant 0 : index
    %c0_15 = arith.constant 0 : index
    %29 = vector.load %arg3[%c0_13, %c0_14, %c0_15] : memref<2x1024x2xf32, #tpu.memory_space<vmem>>, vector<1x1024x2xf32>
    %30 = vector.shape_cast %29 : vector<1x1024x2xf32> to vector<1024x2xf32>
    %cst_16 = arith.constant dense<0.000000e+00> : vector<8x2xf32>
    %31 = tpu.matmul %28, %30, %cst_16 {dimension_numbers = #tpu.dot_dimension_numbers<[1], [0], [0], [1], [0, 0, 1, 1], [], []>} : vector<8x1024xf32>, vector<1024x2xf32>, vector<8x2xf32> -> vector<8x2xf32>
    %c2 = arith.constant 2 : index
    %c0_17 = arith.constant 0 : index
    %32 = vector.load %arg2[%c2, %c0_17] : memref<4x1024xf32, #tpu.memory_space<vmem>>, vector<1x2xf32>
    %33 = vector.broadcast %32 : vector<1x2xf32> to vector<8x2xf32>
    %34 = arith.addf %31, %33 : vector<8x2xf32>
    %c1_18 = arith.constant 1 : index
    %c0_19 = arith.constant 0 : index
    %c0_20 = arith.constant 0 : index
    %35 = vector.load %arg3[%c1_18, %c0_19, %c0_20] : memref<2x1024x2xf32, #tpu.memory_space<vmem>>, vector<1x1024x2xf32>
    %36 = vector.shape_cast %35 : vector<1x1024x2xf32> to vector<1024x2xf32>
    %cst_21 = arith.constant dense<0.000000e+00> : vector<8x2xf32>
    %37 = tpu.matmul %28, %36, %cst_21 {dimension_numbers = #tpu.dot_dimension_numbers<[1], [0], [0], [1], [0, 0, 1, 1], [], []>} : vector<8x1024xf32>, vector<1024x2xf32>, vector<8x2xf32> -> vector<8x2xf32>
    %c3 = arith.constant 3 : index
    %c0_22 = arith.constant 0 : index
    %38 = vector.load %arg2[%c3, %c0_22] : memref<4x1024xf32, #tpu.memory_space<vmem>>, vector<1x2xf32>
    %39 = vector.broadcast %38 : vector<1x2xf32> to vector<8x2xf32>
    %40 = arith.addf %37, %39 : vector<8x2xf32>
    %c0_23 = arith.constant 0 : index
    %c0_24 = arith.constant 0 : index
    %41 = vector.load %arg4[%c0_23, %c0_24] : memref<8x2xf32, #tpu.memory_space<vmem>>, vector<8x2xf32>
    %cst_25 = arith.constant 5.000000e-01 : f32
    %42 = vector.broadcast %cst_25 : f32 to vector<8x2xf32>
    %43 = arith.mulf %42, %40 : vector<8x2xf32>
    %44 = math.exp %43 : vector<8x2xf32>
    %45 = arith.mulf %41, %44 : vector<8x2xf32>
    %46 = arith.addf %45, %34 : vector<8x2xf32>
    %c0_26 = arith.constant 0 : index
    %c0_27 = arith.constant 0 : index
    %c0_28 = arith.constant 0 : index
    %47 = vector.load %arg5[%c0_26, %c0_27, %c0_28] : memref<3x8x2xf32, #tpu.memory_space<vmem>>, vector<1x8x2xf32>
    %48 = vector.shape_cast %47 : vector<1x8x2xf32> to vector<8x2xf32>
    %49 = vector.shape_cast %46 : vector<8x2xf32> to vector<1x8x2xf32>
    tpu.vector_store %arg5[%c0_26, %c0_27, %c0_28], %49 {strides = array<i32>} : memref<3x8x2xf32, #tpu.memory_space<vmem>>, vector<1x8x2xf32>,
    %c1_29 = arith.constant 1 : index
    %c0_30 = arith.constant 0 : index
    %c0_31 = arith.constant 0 : index
    %50 = vector.load %arg5[%c1_29, %c0_30, %c0_31] : memref<3x8x2xf32, #tpu.memory_space<vmem>>, vector<1x8x2xf32>
    %51 = vector.shape_cast %50 : vector<1x8x2xf32> to vector<8x2xf32>
    %52 = vector.shape_cast %34 : vector<8x2xf32> to vector<1x8x2xf32>
    tpu.vector_store %arg5[%c1_29, %c0_30, %c0_31], %52 {strides = array<i32>} : memref<3x8x2xf32, #tpu.memory_space<vmem>>, vector<1x8x2xf32>,
    %c2_32 = arith.constant 2 : index
    %c0_33 = arith.constant 0 : index
    %c0_34 = arith.constant 0 : index
    %53 = vector.load %arg5[%c2_32, %c0_33, %c0_34] : memref<3x8x2xf32, #tpu.memory_space<vmem>>, vector<1x8x2xf32>
    %54 = vector.shape_cast %53 : vector<1x8x2xf32> to vector<8x2xf32>
    %55 = vector.shape_cast %40 : vector<8x2xf32> to vector<1x8x2xf32>
    tpu.vector_store %arg5[%c2_32, %c0_33, %c0_34], %55 {strides = array<i32>} : memref<3x8x2xf32, #tpu.memory_space<vmem>>, vector<1x8x2xf32>,
    return
  }
}

</mosaic_0001>

<llo_original>
// kernel: tpu_custom_call.1
$region0: #{tpu_custom_call.1}
  #allocation0 [shape = 'u32[]', space=smem, size = 0x4, offset = 0x4, fixed_abs, tag = 'smem constant byte address 0x4 - core index']
  #allocation1 [shape = 'u32[144,128]{1,0:T(1,128)}', space=vmem, size = 0x12000, scoped, tag = 'internal scratch']
  %s0 = inlined_call_operand.vmem [shape: f32[8,10], index: 0, kind: input, shape index: {}]
  %s1 = inlined_call_operand.vmem [shape: f32[10,1024], index: 1, kind: input, shape index: {}]
  %s2 = inlined_call_operand.vmem [shape: f32[4,1024], index: 2, kind: input, shape index: {}]
  %s3 = inlined_call_operand.vmem [shape: f32[2,1024,2], index: 3, kind: input, shape index: {}]
  %s4 = inlined_call_operand.vmem [shape: f32[8,2], index: 4, kind: input, shape index: {}]
  %s5 = inlined_call_operand.vmem [shape: f32[3,8,2], index: 5, kind: output, shape index: {}]
  %s6 = sld [smem:[#allocation0]]
  $region30: #{tpu_custom_call.1} parent=0
    _
  %s8 = ssub.s32 1, %s6
  %s9 = scalar_select 0, %s8, %s6
  // Predicated region
  $region2: #{tpu_custom_call.1} parent=0 // pred_check
    _
  $region3: #{tpu_custom_call.1} parent=0 // pred_check_branch
    %11 = sbr.rel (0) target = $region5
  $region4: #{tpu_custom_call.1} parent=0 // pred_region
    _
  $region5: #{tpu_custom_call.1} parent=0 // pred_fallthru
    _
  // Predicated region
  $region6: #{tpu_custom_call.1} parent=0 // pred_check
    _
  $region7: #{tpu_custom_call.1} parent=0 // pred_check_branch
    %13 = sbr.rel (0) target = $region9
  $region8: #{tpu_custom_call.1} parent=0 // pred_region
    _
  $region9: #{tpu_custom_call.1} parent=0 // pred_fallthru
    _
  // Predicated region
  $region10: #{tpu_custom_call.1} parent=0 // pred_check
    _
  $region11: #{tpu_custom_call.1} parent=0 // pred_check_branch
    %15 = sbr.rel (0) target = $region13
  $region12: #{tpu_custom_call.1} parent=0 // pred_region
    _
  $region13: #{tpu_custom_call.1} parent=0 // pred_fallthru
    _
  // Predicated region
  $region14: #{tpu_custom_call.1} parent=0 // pred_check
    _
  $region15: #{tpu_custom_call.1} parent=0 // pred_check_branch
    %17 = sbr.rel (0) target = $region17
  $region16: #{tpu_custom_call.1} parent=0 // pred_region
    _
  $region17: #{tpu_custom_call.1} parent=0 // pred_fallthru
    _
  // Predicated region
  $region18: #{tpu_custom_call.1} parent=0 // pred_check
    _
  $region19: #{tpu_custom_call.1} parent=0 // pred_check_branch
    %19 = sbr.rel (0) target = $region21
  $region20: #{tpu_custom_call.1} parent=0 // pred_region
    _
  $region21: #{tpu_custom_call.1} parent=0 // pred_fallthru
    _
  %v20 = vld [vmem:[%s0] sm:$0xff]
  %v21 = vld [vmem:[%s1] sm:$0xff]
  %v22 = vld [vmem:[%s1 + $0x8] sm:$0xff]
  %v23 = vld [vmem:[%s1 + $0x10] sm:$0xff]
  %v24 = vld [vmem:[%s1 + $0x18] sm:$0xff]
  %v25 = vld [vmem:[%s1 + $0x20] sm:$0xff]
  %v26 = vld [vmem:[%s1 + $0x28] sm:$0xff]
  %v27 = vld [vmem:[%s1 + $0x30] sm:$0xff]
  %v28 = vld [vmem:[%s1 + $0x38] sm:$0xff]
  %v29 = vld [vmem:[%s1 + $0x40] sm:$0x3]
  %v30 = vld [vmem:[%s1 + $0x48] sm:$0x3]
  %v31 = vld [vmem:[%s1 + $0x50] sm:$0x3]
  %v32 = vld [vmem:[%s1 + $0x58] sm:$0x3]
  %v33 = vld [vmem:[%s1 + $0x60] sm:$0x3]
  %v34 = vld [vmem:[%s1 + $0x68] sm:$0x3]
  %v35 = vld [vmem:[%s1 + $0x70] sm:$0x3]
  %v36 = vld [vmem:[%s1 + $0x78] sm:$0x3]
  %vm37 = vcmask 80896
  %v39 = vsel %vm37, %v20, 0
  %vm41 = vcmask 1041408
  %v43 = vsel %vm41, %v29, 0
  %v46 = vsel %vm41, %v30, 0
  %v49 = vsel %vm41, %v31, 0
  %v52 = vsel %vm41, %v32, 0
  %v55 = vsel %vm41, %v33, 0
  %v58 = vsel %vm41, %v34, 0
  %v61 = vsel %vm41, %v35, 0
  %v64 = vsel %vm41, %v36, 0
  %66 = vmatprep.subr.mxu0 %v22
  %67 = vmatpush1.msra.mxu0 %v21
  %68 = vmatprep.subr.mxu0 %v46
  %69 = vmatpush1.msra.mxu0 %v43
  %70 = vmatprep.subr.mxu0 0.0
  %71 = vmatpush1.msra.mxu0 0.0
  %72 = vmatprep.subr.mxu0 0.0
  %73 = vmatpush1.msra.mxu0 0.0
  %74 = vmatprep.subr.mxu0 0.0
  %75 = vmatpush1.msra.mxu0 0.0
  %76 = vmatprep.subr.mxu0 0.0
  %77 = vmatpush1.msra.mxu0 0.0
  %78 = vmatprep.subr.mxu0 0.0
  %79 = vmatpush1.msra.mxu0 0.0
  %80 = vmatprep.subr.mxu0 0.0
  %81 = vmatpush1.msra.mxu0 0.0
  %82 = vmatprep.subr.mxu0 0.0
  %83 = vmatpush1.msra.mxu0 0.0
  %84 = vmatprep.subr.mxu0 0.0
  %85 = vmatpush1.msra.mxu0 0.0
  %86 = vmatprep.subr.mxu0 0.0
  %87 = vmatpush1.msra.mxu0 0.0
  %88 = vmatprep.subr.mxu0 0.0
  %89 = vmatpush1.msra.mxu0 0.0
  %90 = vmatprep.subr.mxu0 0.0
  %91 = vmatpush1.msra.mxu0 0.0
  %92 = vmatprep.subr.mxu0 0.0
  %93 = vmatpush1.msra.mxu0 0.0
  %94 = vmatprep.subr.mxu0 0.0
  %95 = vmatpush1.msra.mxu0 0.0
  %96 = vmatprep.subr.mxu0 0.0
  %97 = vmatpush1.msra.mxu0 0.0
  %98 = vmatprep.subr.mxu0 0.0
  %99 = vmatpush1.msra.mxu0 0.0
  %100 = vmatprep.subr.mxu0 0.0
  %101 = vmatpush1.msra.mxu0 0.0
  %102 = vmatprep.subr.mxu0 0.0
  %103 = vmatpush1.msra.mxu0 0.0
  %104 = vmatprep.subr.mxu0 0.0
  %105 = vmatpush1.msra.mxu0 0.0
  %106 = vmatprep.subr.mxu0 0.0
  %107 = vmatpush1.msra.mxu0 0.0
  %108 = vmatprep.subr.mxu0 0.0
  %109 = vmatpush1.msra.mxu0 0.0
  %110 = vmatprep.subr.mxu0 0.0
  %111 = vmatpush1.msra.mxu0 0.0
  %112 = vmatprep.subr.mxu0 0.0
  %113 = vmatpush1.msra.mxu0 0.0
  %114 = vmatprep.subr.mxu0 0.0
  %115 = vmatpush1.msra.mxu0 0.0
  %116 = vmatprep.subr.mxu0 0.0
  %117 = vmatpush1.msra.mxu0 0.0
  %118 = vmatprep.subr.mxu0 0.0
  %119 = vmatpush1.msra.mxu0 0.0
  %120 = vmatprep.subr.mxu0 0.0
  %121 = vmatpush1.msra.mxu0 0.0
  %122 = vmatprep.subr.mxu0 0.0
  %123 = vmatpush1.msra.mxu0 0.0
  %124 = vmatprep.subr.mxu0 0.0
  %125 = vmatpush1.msra.mxu0 0.0
  %126 = vmatprep.subr.mxu0 0.0
  %127 = vmatpush1.msra.mxu0 0.0
  %128 = vmatprep.subr.mxu0 0.0
  %129 = vmatpush1.msra.mxu0 0.0
  %130 = vmatprep.mubr.f32.mxu0 0.0
  %131 = vmatmul.mubr.f32.gmra.mrb[0].mxu0 %v39
  %v132 = vpop.f32.mrb[0].mxu0
  %v133 = vadd.f32 0.0, %v132
  %v134 = vpop.f32.mrb[0].mxu0
  %v135 = vadd.f32 0.0, %v134
  %136 = vdwg.mxu0
  %137 = vmatprep.subr.mxu0 %v24
  %138 = vmatpush1.msra.mxu0 %v23
  %139 = vmatprep.subr.mxu0 %v52
  %140 = vmatpush1.msra.mxu0 %v49
  %141 = vmatprep.subr.mxu0 0.0
  %142 = vmatpush1.msra.mxu0 0.0
  %143 = vmatprep.subr.mxu0 0.0
  %144 = vmatpush1.msra.mxu0 0.0
  %145 = vmatprep.subr.mxu0 0.0
  %146 = vmatpush1.msra.mxu0 0.0
  %147 = vmatprep.subr.mxu0 0.0
  %148 = vmatpush1.msra.mxu0 0.0
  %149 = vmatprep.subr.mxu0 0.0
  %150 = vmatpush1.msra.mxu0 0.0
  %151 = vmatprep.subr.mxu0 0.0
  %152 = vmatpush1.msra.mxu0 0.0
  %153 = vmatprep.subr.mxu0 0.0
  %154 = vmatpush1.msra.mxu0 0.0
  %155 = vmatprep.subr.mxu0 0.0
  %156 = vmatpush1.msra.mxu0 0.0
  %157 = vmatprep.subr.mxu0 0.0
  %158 = vmatpush1.msra.mxu0 0.0
  %159 = vmatprep.subr.mxu0 0.0
  %160 = vmatpush1.msra.mxu0 0.0
  %161 = vmatprep.subr.mxu0 0.0
  %162 = vmatpush1.msra.mxu0 0.0
  %163 = vmatprep.subr.mxu0 0.0
  %164 = vmatpush1.msra.mxu0 0.0
  %165 = vmatprep.subr.mxu0 0.0
  %166 = vmatpush1.msra.mxu0 0.0
  %167 = vmatprep.subr.mxu0 0.0
  %168 = vmatpush1.msra.mxu0 0.0
  %169 = vmatprep.subr.mxu0 0.0
  %170 = vmatpush1.msra.mxu0 0.0
  %171 = vmatprep.subr.mxu0 0.0
  %172 = vmatpush1.msra.mxu0 0.0
  %173 = vmatprep.subr.mxu0 0.0
  %174 = vmatpush1.msra.mxu0 0.0
  %175 = vmatprep.subr.mxu0 0.0
  %176 = vmatpush1.msra.mxu0 0.0
  %177 = vmatprep.subr.mxu0 0.0
  %178 = vmatpush1.msra.mxu0 0.0
  %179 = vmatprep.subr.mxu0 0.0
  %180 = vmatpush1.msra.mxu0 0.0
  %181 = vmatprep.subr.mxu0 0.0
  %182 = vmatpush1.msra.mxu0 0.0
  %183 = vmatprep.subr.mxu0 0.0
  %184 = vmatpush1.msra.mxu0 0.0
  %185 = vmatprep.subr.mxu0 0.0
  %186 = vmatpush1.msra.mxu0 0.0
  %187 = vmatprep.subr.mxu0 0.0
  %188 = vmatpush1.msra.mxu0 0.0
  %189 = vmatprep.subr.mxu0 0.0
  %190 = vmatpush1.msra.mxu0 0.0
  %191 = vmatprep.subr.mxu0 0.0
  %192 = vmatpush1.msra.mxu0 0.0
  %193 = vmatprep.subr.mxu0 0.0
  %194 = vmatpush1.msra.mxu0 0.0
  %195 = vmatprep.subr.mxu0 0.0
  %196 = vmatpush1.msra.mxu0 0.0
  %197 = vmatprep.subr.mxu0 0.0
  %198 = vmatpush1.msra.mxu0 0.0
  %199 = vmatprep.subr.mxu0 0.0
  %200 = vmatpush1.msra.mxu0 0.0
  %201 = vmatprep.mubr.f32.mxu0 0.0
  %202 = vmatmul.mubr.f32.gmra.mrb[0].mxu0 %v39
  %v203 = vpop.f32.mrb[0].mxu0
  %v204 = vadd.f32 0.0, %v203
  %v205 = vpop.f32.mrb[0].mxu0
  %v206 = vadd.f32 0.0, %v205
  %207 = vdwg.mxu0
  %208 = vmatprep.subr.mxu0 %v26
  %209 = vmatpush1.msra.mxu0 %v25
  %210 = vmatprep.subr.mxu0 %v58
  %211 = vmatpush1.msra.mxu0 %v55
  %212 = vmatprep.subr.mxu0 0.0
  %213 = vmatpush1.msra.mxu0 0.0
  %214 = vmatprep.subr.mxu0 0.0
  %215 = vmatpush1.msra.mxu0 0.0
  %216 = vmatprep.subr.mxu0 0.0
  %217 = vmatpush1.msra.mxu0 0.0
  %218 = vmatprep.subr.mxu0 0.0
  %219 = vmatpush1.msra.mxu0 0.0
  %220 = vmatprep.subr.mxu0 0.0
  %221 = vmatpush1.msra.mxu0 0.0
  %222 = vmatprep.subr.mxu0 0.0
  %223 = vmatpush1.msra.mxu0 0.0
  %224 = vmatprep.subr.mxu0 0.0
  %225 = vmatpush1.msra.mxu0 0.0
  %226 = vmatprep.subr.mxu0 0.0
  %227 = vmatpush1.msra.mxu0 0.0
  %228 = vmatprep.subr.mxu0 0.0
  %229 = vmatpush1.msra.mxu0 0.0
  %230 = vmatprep.subr.mxu0 0.0
  %231 = vmatpush1.msra.mxu0 0.0
  %232 = vmatprep.subr.mxu0 0.0
  %233 = vmatpush1.msra.mxu0 0.0
  %234 = vmatprep.subr.mxu0 0.0
  %235 = vmatpush1.msra.mxu0 0.0
  %236 = vmatprep.subr.mxu0 0.0
  %237 = vmatpush1.msra.mxu0 0.0
  %238 = vmatprep.subr.mxu0 0.0
  %239 = vmatpush1.msra.mxu0 0.0
  %240 = vmatprep.subr.mxu0 0.0
  %241 = vmatpush1.msra.mxu0 0.0
  %242 = vmatprep.subr.mxu0 0.0
  %243 = vmatpush1.msra.mxu0 0.0
  %244 = vmatprep.subr.mxu0 0.0
  %245 = vmatpush1.msra.mxu0 0.0
  %246 = vmatprep.subr.mxu0 0.0
  %247 = vmatpush1.msra.mxu0 0.0
  %248 = vmatprep.subr.mxu0 0.0
  %249 = vmatpush1.msra.mxu0 0.0
  %250 = vmatprep.subr.mxu0 0.0
  %251 = vmatpush1.msra.mxu0 0.0
  %252 = vmatprep.subr.mxu0 0.0
  %253 = vmatpush1.msra.mxu0 0.0
  %254 = vmatprep.subr.mxu0 0.0
  %255 = vmatpush1.msra.mxu0 0.0
  %256 = vmatprep.subr.mxu0 0.0
  %257 = vmatpush1.msra.mxu0 0.0
  %258 = vmatprep.subr.mxu0 0.0
  %259 = vmatpush1.msra.mxu0 0.0
  %260 = vmatprep.subr.mxu0 0.0
  %261 = vmatpush1.msra.mxu0 0.0
  %262 = vmatprep.subr.mxu0 0.0
  %263 = vmatpush1.msra.mxu0 0.0
  %264 = vmatprep.subr.mxu0 0.0
  %265 = vmatpush1.msra.mxu0 0.0
  %266 = vmatprep.subr.mxu0 0.0
  %267 = vmatpush1.msra.mxu0 0.0
  %268 = vmatprep.subr.mxu0 0.0
  %269 = vmatpush1.msra.mxu0 0.0
  %270 = vmatprep.subr.mxu0 0.0
  %271 = vmatpush1.msra.mxu0 0.0
  %272 = vmatprep.mubr.f32.mxu0 0.0
  %273 = vmatmul.mubr.f32.gmra.mrb[0].mxu0 %v39
  %v274 = vpop.f32.mrb[0].mxu0
  %v275 = vadd.f32 0.0, %v274
  %v276 = vpop.f32.mrb[0].mxu0
  %v277 = vadd.f32 0.0, %v276
  %278 = vdwg.mxu0
  %279 = vmatprep.subr.mxu0 %v28
  %280 = vmatpush1.msra.mxu0 %v27
  %281 = vmatprep.subr.mxu0 %v64
  %282 = vmatpush1.msra.mxu0 %v61
  %283 = vmatprep.subr.mxu0 0.0
  %284 = vmatpush1.msra.mxu0 0.0
  %285 = vmatprep.subr.mxu0 0.0
  %286 = vmatpush1.msra.mxu0 0.0
  %287 = vmatprep.subr.mxu0 0.0
  %288 = vmatpush1.msra.mxu0 0.0
  %289 = vmatprep.subr.mxu0 0.0
  %290 = vmatpush1.msra.mxu0 0.0
  %291 = vmatprep.subr.mxu0 0.0
  %292 = vmatpush1.msra.mxu0 0.0
  %293 = vmatprep.subr.mxu0 0.0
  %294 = vmatpush1.msra.mxu0 0.0
  %295 = vmatprep.subr.mxu0 0.0
  %296 = vmatpush1.msra.mxu0 0.0
  %297 = vmatprep.subr.mxu0 0.0
  %298 = vmatpush1.msra.mxu0 0.0
  %299 = vmatprep.subr.mxu0 0.0
  %300 = vmatpush1.msra.mxu0 0.0
  %301 = vmatprep.subr.mxu0 0.0
  %302 = vmatpush1.msra.mxu0 0.0
  %303 = vmatprep.subr.mxu0 0.0
  %304 = vmatpush1.msra.mxu0 0.0
  %305 = vmatprep.subr.mxu0 0.0
  %306 = vmatpush1.msra.mxu0 0.0
  %307 = vmatprep.subr.mxu0 0.0
  %308 = vmatpush1.msra.mxu0 0.0
  %309 = vmatprep.subr.mxu0 0.0
  %310 = vmatpush1.msra.mxu0 0.0
  %311 = vmatprep.subr.mxu0 0.0
  %312 = vmatpush1.msra.mxu0 0.0
  %313 = vmatprep.subr.mxu0 0.0
  %314 = vmatpush1.msra.mxu0 0.0
  %315 = vmatprep.subr.mxu0 0.0
  %316 = vmatpush1.msra.mxu0 0.0
  %317 = vmatprep.subr.mxu0 0.0
  %318 = vmatpush1.msra.mxu0 0.0
  %319 = vmatprep.subr.mxu0 0.0
  %320 = vmatpush1.msra.mxu0 0.0
  %321 = vmatprep.subr.mxu0 0.0
  %322 = vmatpush1.msra.mxu0 0.0
  %323 = vmatprep.subr.mxu0 0.0
  %324 = vmatpush1.msra.mxu0 0.0
  %325 = vmatprep.subr.mxu0 0.0
  %326 = vmatpush1.msra.mxu0 0.0
  %327 = vmatprep.subr.mxu0 0.0
  %328 = vmatpush1.msra.mxu0 0.0
  %329 = vmatprep.subr.mxu0 0.0
  %330 = vmatpush1.msra.mxu0 0.0
  %331 = vmatprep.subr.mxu0 0.0
  %332 = vmatpush1.msra.mxu0 0.0
  %333 = vmatprep.subr.mxu0 0.0
  %334 = vmatpush1.msra.mxu0 0.0
  %335 = vmatprep.subr.mxu0 0.0
  %336 = vmatpush1.msra.mxu0 0.0
  %337 = vmatprep.subr.mxu0 0.0
  %338 = vmatpush1.msra.mxu0 0.0
  %339 = vmatprep.subr.mxu0 0.0
  %340 = vmatpush1.msra.mxu0 0.0
  %341 = vmatprep.subr.mxu0 0.0
  %342 = vmatpush1.msra.mxu0 0.0
  %343 = vmatprep.mubr.f32.mxu0 0.0
  %344 = vmatmul.mubr.f32.gmra.mrb[0].mxu0 %v39
  %v345 = vpop.f32.mrb[0].mxu0
  %v346 = vadd.f32 0.0, %v345
  %v347 = vpop.f32.mrb[0].mxu0
  %v348 = vadd.f32 0.0, %v347
  %349 = vdwg.mxu0
  %v350 = vrot.slane %v133, 4
  %v351 = vadd.f32 %v133, %v350
  %v352 = vrot.slane %v351, 2
  %v353 = vadd.f32 %v351, %v352
  %v354 = vrot.slane %v353, 1
  %v355 = vadd.f32 %v353, %v354
  %v356 = vrot.slane %v135, 4
  %v357 = vadd.f32 %v135, %v356
  %v358 = vrot.slane %v357, 2
  %v359 = vadd.f32 %v357, %v358
  %v360 = vrot.slane %v359, 1
  %v361 = vadd.f32 %v359, %v360
  %v362 = vrot.slane %v204, 4
  %v363 = vadd.f32 %v204, %v362
  %v364 = vrot.slane %v363, 2
  %v365 = vadd.f32 %v363, %v364
  %v366 = vrot.slane %v365, 1
  %v367 = vadd.f32 %v365, %v366
  %v368 = vrot.slane %v206, 4
  %v369 = vadd.f32 %v206, %v368
  %v370 = vrot.slane %v369, 2
  %v371 = vadd.f32 %v369, %v370
  %v372 = vrot.slane %v371, 1
  %v373 = vadd.f32 %v371, %v372
  %v374 = vrot.slane %v275, 4
  %v375 = vadd.f32 %v275, %v374
  %v376 = vrot.slane %v375, 2
  %v377 = vadd.f32 %v375, %v376
  %v378 = vrot.slane %v377, 1
  %v379 = vadd.f32 %v377, %v378
  %v380 = vrot.slane %v277, 4
  %v381 = vadd.f32 %v277, %v380
  %v382 = vrot.slane %v381, 2
  %v383 = vadd.f32 %v381, %v382
  %v384 = vrot.slane %v383, 1
  %v385 = vadd.f32 %v383, %v384
  %v386 = vrot.slane %v346, 4
  %v387 = vadd.f32 %v346, %v386
  %v388 = vrot.slane %v387, 2
  %v389 = vadd.f32 %v387, %v388
  %v390 = vrot.slane %v389, 1
  %v391 = vadd.f32 %v389, %v390
  %v392 = vrot.slane %v348, 4
  %v393 = vadd.f32 %v348, %v392
  %v394 = vrot.slane %v393, 2
  %v395 = vadd.f32 %v393, %v394
  %v396 = vrot.slane %v395, 1
  %v397 = vadd.f32 %v395, %v396
  %v398 = vrcp.pop 8.0
  %v399 = vmul.f32 %v355, %v398
  %v400 = vmul.f32 %v361, %v398
  %v401 = vmul.f32 %v367, %v398
  %v402 = vmul.f32 %v373, %v398
  %v403 = vmul.f32 %v379, %v398
  %v404 = vmul.f32 %v385, %v398
  %v405 = vmul.f32 %v391, %v398
  %v406 = vmul.f32 %v397, %v398
  %v407 = vsub.f32 %v133, %v399
  %v408 = vsub.f32 %v135, %v400
  %v409 = vsub.f32 %v204, %v401
  %v410 = vsub.f32 %v206, %v402
  %v411 = vsub.f32 %v275, %v403
  %v412 = vsub.f32 %v277, %v404
  %v413 = vsub.f32 %v346, %v405
  %v414 = vsub.f32 %v348, %v406
  %v415 = vmul.f32 %v407, %v407
  %v416 = vmul.f32 %v408, %v408
  %v417 = vmul.f32 %v409, %v409
  %v418 = vmul.f32 %v410, %v410
  %v419 = vmul.f32 %v411, %v411
  %v420 = vmul.f32 %v412, %v412
  %v421 = vmul.f32 %v413, %v413
  %v422 = vmul.f32 %v414, %v414
  %v423 = vrot.slane %v415, 4
  %v424 = vadd.f32 %v415, %v423
  %v425 = vrot.slane %v424, 2
  %v426 = vadd.f32 %v424, %v425
  %v427 = vrot.slane %v426, 1
  %v428 = vadd.f32 %v426, %v427
  %v429 = vrot.slane %v416, 4
  %v430 = vadd.f32 %v416, %v429
  %v431 = vrot.slane %v430, 2
  %v432 = vadd.f32 %v430, %v431
  %v433 = vrot.slane %v432, 1
  %v434 = vadd.f32 %v432, %v433
  %v435 = vrot.slane %v417, 4
  %v436 = vadd.f32 %v417, %v435
  %v437 = vrot.slane %v436, 2
  %v438 = vadd.f32 %v436, %v437
  %v439 = vrot.slane %v438, 1
  %v440 = vadd.f32 %v438, %v439
  %v441 = vrot.slane %v418, 4
  %v442 = vadd.f32 %v418, %v441
  %v443 = vrot.slane %v442, 2
  %v444 = vadd.f32 %v442, %v443
  %v445 = vrot.slane %v444, 1
  %v446 = vadd.f32 %v444, %v445
  %v447 = vrot.slane %v419, 4
  %v448 = vadd.f32 %v419, %v447
  %v449 = vrot.slane %v448, 2
  %v450 = vadd.f32 %v448, %v449
  %v451 = vrot.slane %v450, 1
  %v452 = vadd.f32 %v450, %v451
  %v453 = vrot.slane %v420, 4
  %v454 = vadd.f32 %v420, %v453
  %v455 = vrot.slane %v454, 2
  %v456 = vadd.f32 %v454, %v455
  %v457 = vrot.slane %v456, 1
  %v458 = vadd.f32 %v456, %v457
  %v459 = vrot.slane %v421, 4
  %v460 = vadd.f32 %v421, %v459
  %v461 = vrot.slane %v460, 2
  %v462 = vadd.f32 %v460, %v461
  %v463 = vrot.slane %v462, 1
  %v464 = vadd.f32 %v462, %v463
  %v465 = vrot.slane %v422, 4
  %v466 = vadd.f32 %v422, %v465
  %v467 = vrot.slane %v466, 2
  %v468 = vadd.f32 %v466, %v467
  %v469 = vrot.slane %v468, 1
  %v470 = vadd.f32 %v468, %v469
  %v471 = vmul.f32 %v428, %v398
  %v472 = vmul.f32 %v434, %v398
  %v473 = vmul.f32 %v440, %v398
  %v474 = vmul.f32 %v446, %v398
  %v475 = vmul.f32 %v452, %v398
  %v476 = vmul.f32 %v458, %v398
  %v477 = vmul.f32 %v464, %v398
  %v478 = vmul.f32 %v470, %v398
  %v479 = vld [vmem:[%s2] ss:$4 sm:$0xff]
  %v480 = vadd.f32 %v471, 1e-05
  %v481 = vadd.f32 %v472, 1e-05
  %v482 = vadd.f32 %v473, 1e-05
  %v483 = vadd.f32 %v474, 1e-05
  %v484 = vadd.f32 %v475, 1e-05
  %v485 = vadd.f32 %v476, 1e-05
  %v486 = vadd.f32 %v477, 1e-05
  %v487 = vadd.f32 %v478, 1e-05
  %v488 = vrsqrt.pop %v480
  %v489 = vrsqrt.pop %v481
  %v490 = vrsqrt.pop %v482
  %v491 = vrsqrt.pop %v483
  %v492 = vrsqrt.pop %v484
  %v493 = vrsqrt.pop %v485
  %v494 = vrsqrt.pop %v486
  %v495 = vrsqrt.pop %v487
  %v504 = vcombine.low %v488, %v489
  %v505 = vcombine.low %v490, %v491
  %v506 = vcombine.low %v492, %v493
  %v507 = vcombine.low %v494, %v495
  %v509 = vunpack.c.l.s4 1966171168
  %v510 = vunpack.c.0.s8 %v509
  %v511 = vlaneseq
  %v512 = vshrl.u32 %v511, 7
  %v513 = vsub.s32 %v510, %v512
  %v514 = vrot.slane %v504, %v513
  %v516 = vunpack.c.l.s4 1966171168
  %v517 = vunpack.c.0.s8 %v516
  %v518 = vlaneseq
  %v519 = vshrl.u32 %v518, 7
  %v520 = vsub.s32 %v517, %v519
  %v521 = vrot.slane %v505, %v520
  %v523 = vunpack.c.l.s4 1966171168
  %v524 = vunpack.c.0.s8 %v523
  %v525 = vlaneseq
  %v526 = vshrl.u32 %v525, 7
  %v527 = vsub.s32 %v524, %v526
  %v528 = vrot.slane %v506, %v527
  %v530 = vunpack.c.l.s4 1966171168
  %v531 = vunpack.c.0.s8 %v530
  %v532 = vlaneseq
  %v533 = vshrl.u32 %v532, 7
  %v534 = vsub.s32 %v531, %v533
  %v535 = vrot.slane %v507, %v534
  %v536 = vcombine.low %v514, %v521
  %v537 = vcombine.low %v528, %v535
  %v539 = vunpack.c.l.s4 1966171168
  %v540 = vunpack.c.0.s8 %v539
  %v541 = vlaneseq
  %v542 = vshrl.u32 %v541, 7
  %v543 = vsub.s32 %v540, %v542
  %v544 = vrot.slane %v536, %v543
  %v546 = vunpack.c.l.s4 1966171168
  %v547 = vunpack.c.0.s8 %v546
  %v548 = vlaneseq
  %v549 = vshrl.u32 %v548, 7
  %v550 = vsub.s32 %v547, %v549
  %v551 = vrot.slane %v537, %v550
  %v552 = vcombine.low %v544, %v551
  %v554 = vmul.f32 %v479, %v552
  %v556 = vlaneseq
  %v557 = vshrl.u32 %v556, 7
  %v558 = vsub.s32 0, %v557
  %v559 = vrot.slane %v554, %v558
  %v560 = vlaneseq
  %v561 = vshrl.u32 %v560, 7
  %v562 = vsub.s32 1, %v561
  %v563 = vrot.slane %v554, %v562
  %v564 = vlaneseq
  %v565 = vshrl.u32 %v564, 7
  %v566 = vsub.s32 2, %v565
  %v567 = vrot.slane %v554, %v566
  %v568 = vlaneseq
  %v569 = vshrl.u32 %v568, 7
  %v570 = vsub.s32 3, %v569
  %v571 = vrot.slane %v554, %v570
  %v572 = vlaneseq
  %v573 = vshrl.u32 %v572, 7
  %v574 = vsub.s32 4, %v573
  %v575 = vrot.slane %v554, %v574
  %v576 = vlaneseq
  %v577 = vshrl.u32 %v576, 7
  %v578 = vsub.s32 5, %v577
  %v579 = vrot.slane %v554, %v578
  %v580 = vlaneseq
  %v581 = vshrl.u32 %v580, 7
  %v582 = vsub.s32 6, %v581
  %v583 = vrot.slane %v554, %v582
  %v584 = vlaneseq
  %v585 = vshrl.u32 %v584, 7
  %v586 = vsub.s32 7, %v585
  %v587 = vrot.slane %v554, %v586
  %v596 = vmul.f32 %v407, %v559
  %v597 = vmul.f32 %v408, %v563
  %v598 = vmul.f32 %v409, %v567
  %v599 = vmul.f32 %v410, %v571
  %v600 = vmul.f32 %v411, %v575
  %v601 = vmul.f32 %v412, %v579
  %v602 = vmul.f32 %v413, %v583
  %v603 = vmul.f32 %v414, %v587
  %s604 = scalar_lea.vmem %s2, 1
  %v605 = vld [vmem:[%s604] ss:$4 sm:$0xff]
  %v607 = vlaneseq
  %v608 = vshrl.u32 %v607, 7
  %v609 = vsub.s32 0, %v608
  %v610 = vrot.slane %v605, %v609
  %v611 = vlaneseq
  %v612 = vshrl.u32 %v611, 7
  %v613 = vsub.s32 1, %v612
  %v614 = vrot.slane %v605, %v613
  %v615 = vlaneseq
  %v616 = vshrl.u32 %v615, 7
  %v617 = vsub.s32 2, %v616
  %v618 = vrot.slane %v605, %v617
  %v619 = vlaneseq
  %v620 = vshrl.u32 %v619, 7
  %v621 = vsub.s32 3, %v620
  %v622 = vrot.slane %v605, %v621
  %v623 = vlaneseq
  %v624 = vshrl.u32 %v623, 7
  %v625 = vsub.s32 4, %v624
  %v626 = vrot.slane %v605, %v625
  %v627 = vlaneseq
  %v628 = vshrl.u32 %v627, 7
  %v629 = vsub.s32 5, %v628
  %v630 = vrot.slane %v605, %v629
  %v631 = vlaneseq
  %v632 = vshrl.u32 %v631, 7
  %v633 = vsub.s32 6, %v632
  %v634 = vrot.slane %v605, %v633
  %v635 = vlaneseq
  %v636 = vshrl.u32 %v635, 7
  %v637 = vsub.s32 7, %v636
  %v638 = vrot.slane %v605, %v637
  %v647 = vadd.f32 %v596, %v610
  %v648 = vadd.f32 %v597, %v614
  %v649 = vadd.f32 %v598, %v618
  %v650 = vadd.f32 %v599, %v622
  %v651 = vadd.f32 %v600, %v626
  %v652 = vadd.f32 %v601, %v630
  %v653 = vadd.f32 %v602, %v634
  %v654 = vadd.f32 %v603, %v638
  %vm655 = vcmp.ge.f32.partialorder %v647, 0.0
  %vm656 = vcmp.ge.f32.partialorder %v648, 0.0
  %vm657 = vcmp.ge.f32.partialorder %v649, 0.0
  %vm658 = vcmp.ge.f32.partialorder %v650, 0.0
  %vm659 = vcmp.ge.f32.partialorder %v651, 0.0
  %vm660 = vcmp.ge.f32.partialorder %v652, 0.0
  %vm661 = vcmp.ge.f32.partialorder %v653, 0.0
  %vm662 = vcmp.ge.f32.partialorder %v654, 0.0
  %v663 = vmul.f32 %v647, 0.2
  %v664 = vmul.f32 %v648, 0.2
  %v665 = vmul.f32 %v649, 0.2
  %v666 = vmul.f32 %v650, 0.2
  %v667 = vmul.f32 %v651, 0.2
  %v668 = vmul.f32 %v652, 0.2
  %v669 = vmul.f32 %v653, 0.2
  %v670 = vmul.f32 %v654, 0.2
  %v671 = vsel %vm655, %v647, %v663
  %v672 = vsel %vm656, %v648, %v664
  %v673 = vsel %vm657, %v649, %v665
  %v674 = vsel %vm658, %v650, %v666
  %v675 = vsel %vm659, %v651, %v667
  %v676 = vsel %vm660, %v652, %v668
  %v677 = vsel %vm661, %v653, %v669
  %v678 = vsel %vm662, %v654, %v670
  %v679 = vld [vmem:[%s3] sm:$0xff]
  %v680 = vld [vmem:[%s3 + $0x8] sm:$0xff]
  %v681 = vld [vmem:[%s3 + $0x10] sm:$0xff]
  %v682 = vld [vmem:[%s3 + $0x18] sm:$0xff]
  %v683 = vld [vmem:[%s3 + $0x20] sm:$0xff]
  %v684 = vld [vmem:[%s3 + $0x28] sm:$0xff]
  %v685 = vld [vmem:[%s3 + $0x30] sm:$0xff]
  %v686 = vld [vmem:[%s3 + $0x38] sm:$0xff]
  %v687 = vld [vmem:[%s3 + $0x40] sm:$0xff]
  %v688 = vld [vmem:[%s3 + $0x48] sm:$0xff]
  %v689 = vld [vmem:[%s3 + $0x50] sm:$0xff]
  %v690 = vld [vmem:[%s3 + $0x58] sm:$0xff]
  %v691 = vld [vmem:[%s3 + $0x60] sm:$0xff]
  %v692 = vld [vmem:[%s3 + $0x68] sm:$0xff]
  %v693 = vld [vmem:[%s3 + $0x70] sm:$0xff]
  %v694 = vld [vmem:[%s3 + $0x78] sm:$0xff]
  %v695 = vld [vmem:[%s3 + $0x80] sm:$0xff]
  %v696 = vld [vmem:[%s3 + $0x88] sm:$0xff]
  %v697 = vld [vmem:[%s3 + $0x90] sm:$0xff]
  %v698 = vld [vmem:[%s3 + $0x98] sm:$0xff]
  %v699 = vld [vmem:[%s3 + $0xa0] sm:$0xff]
  %v700 = vld [vmem:[%s3 + $0xa8] sm:$0xff]
  %v701 = vld [vmem:[%s3 + $0xb0] sm:$0xff]
  %v702 = vld [vmem:[%s3 + $0xb8] sm:$0xff]
  %v703 = vld [vmem:[%s3 + $0xc0] sm:$0xff]
  %v704 = vld [vmem:[%s3 + $0xc8] sm:$0xff]
  %v705 = vld [vmem:[%s3 + $0xd0] sm:$0xff]
  %v706 = vld [vmem:[%s3 + $0xd8] sm:$0xff]
  %v707 = vld [vmem:[%s3 + $0xe0] sm:$0xff]
  %v708 = vld [vmem:[%s3 + $0xe8] sm:$0xff]
  %v709 = vld [vmem:[%s3 + $0xf0] sm:$0xff]
  %v710 = vld [vmem:[%s3 + $0xf8] sm:$0xff]
  %v711 = vld [vmem:[%s3 + $0x100] sm:$0xff]
  %v712 = vld [vmem:[%s3 + $0x108] sm:$0xff]
  %v713 = vld [vmem:[%s3 + $0x110] sm:$0xff]
  %v714 = vld [vmem:[%s3 + $0x118] sm:$0xff]
  %v715 = vld [vmem:[%s3 + $0x120] sm:$0xff]
  %v716 = vld [vmem:[%s3 + $0x128] sm:$0xff]
  %v717 = vld [vmem:[%s3 + $0x130] sm:$0xff]
  %v718 = vld [vmem:[%s3 + $0x138] sm:$0xff]
  %v719 = vld [vmem:[%s3 + $0x140] sm:$0xff]
  %v720 = vld [vmem:[%s3 + $0x148] sm:$0xff]
  %v721 = vld [vmem:[%s3 + $0x150] sm:$0xff]
  %v722 = vld [vmem:[%s3 + $0x158] sm:$0xff]
  %v723 = vld [vmem:[%s3 + $0x160] sm:$0xff]
  %v724 = vld [vmem:[%s3 + $0x168] sm:$0xff]
  %v725 = vld [vmem:[%s3 + $0x170] sm:$0xff]
  %v726 = vld [vmem:[%s3 + $0x178] sm:$0xff]
  %v727 = vld [vmem:[%s3 + $0x180] sm:$0xff]
  %v728 = vld [vmem:[%s3 + $0x188] sm:$0xff]
  %v729 = vld [vmem:[%s3 + $0x190] sm:$0xff]
  %v730 = vld [vmem:[%s3 + $0x198] sm:$0xff]
  %v731 = vld [vmem:[%s3 + $0x1a0] sm:$0xff]
  %v732 = vld [vmem:[%s3 + $0x1a8] sm:$0xff]
  %v733 = vld [vmem:[%s3 + $0x1b0] sm:$0xff]
  %v734 = vld [vmem:[%s3 + $0x1b8] sm:$0xff]
  %v735 = vld [vmem:[%s3 + $0x1c0] sm:$0xff]
  %v736 = vld [vmem:[%s3 + $0x1c8] sm:$0xff]
  %v737 = vld [vmem:[%s3 + $0x1d0] sm:$0xff]
  %v738 = vld [vmem:[%s3 + $0x1d8] sm:$0xff]
  %v739 = vld [vmem:[%s3 + $0x1e0] sm:$0xff]
  %v740 = vld [vmem:[%s3 + $0x1e8] sm:$0xff]
  %v741 = vld [vmem:[%s3 + $0x1f0] sm:$0xff]
  %v742 = vld [vmem:[%s3 + $0x1f8] sm:$0xff]
  %v743 = vld [vmem:[%s3 + $0x200] sm:$0xff]
  %v744 = vld [vmem:[%s3 + $0x208] sm:$0xff]
  %v745 = vld [vmem:[%s3 + $0x210] sm:$0xff]
  %v746 = vld [vmem:[%s3 + $0x218] sm:$0xff]
  %v747 = vld [vmem:[%s3 + $0x220] sm:$0xff]
  %v748 = vld [vmem:[%s3 + $0x228] sm:$0xff]
  %v749 = vld [vmem:[%s3 + $0x230] sm:$0xff]
  %v750 = vld [vmem:[%s3 + $0x238] sm:$0xff]
  %v751 = vld [vmem:[%s3 + $0x240] sm:$0xff]
  %v752 = vld [vmem:[%s3 + $0x248] sm:$0xff]
  %v753 = vld [vmem:[%s3 + $0x250] sm:$0xff]
  %v754 = vld [vmem:[%s3 + $0x258] sm:$0xff]
  %v755 = vld [vmem:[%s3 + $0x260] sm:$0xff]
  %v756 = vld [vmem:[%s3 + $0x268] sm:$0xff]
  %v757 = vld [vmem:[%s3 + $0x270] sm:$0xff]
  %v758 = vld [vmem:[%s3 + $0x278] sm:$0xff]
  %v759 = vld [vmem:[%s3 + $0x280] sm:$0xff]
  %v760 = vld [vmem:[%s3 + $0x288] sm:$0xff]
  %v761 = vld [vmem:[%s3 + $0x290] sm:$0xff]
  %v762 = vld [vmem:[%s3 + $0x298] sm:$0xff]
  %v763 = vld [vmem:[%s3 + $0x2a0] sm:$0xff]
  %v764 = vld [vmem:[%s3 + $0x2a8] sm:$0xff]
  %v765 = vld [vmem:[%s3 + $0x2b0] sm:$0xff]
  %v766 = vld [vmem:[%s3 + $0x2b8] sm:$0xff]
  %v767 = vld [vmem:[%s3 + $0x2c0] sm:$0xff]
  %v768 = vld [vmem:[%s3 + $0x2c8] sm:$0xff]
  %v769 = vld [vmem:[%s3 + $0x2d0] sm:$0xff]
  %v770 = vld [vmem:[%s3 + $0x2d8] sm:$0xff]
  %v771 = vld [vmem:[%s3 + $0x2e0] sm:$0xff]
  %v772 = vld [vmem:[%s3 + $0x2e8] sm:$0xff]
  %v773 = vld [vmem:[%s3 + $0x2f0] sm:$0xff]
  %v774 = vld [vmem:[%s3 + $0x2f8] sm:$0xff]
  %v775 = vld [vmem:[%s3 + $0x300] sm:$0xff]
  %v776 = vld [vmem:[%s3 + $0x308] sm:$0xff]
  %v777 = vld [vmem:[%s3 + $0x310] sm:$0xff]
  %v778 = vld [vmem:[%s3 + $0x318] sm:$0xff]
  %v779 = vld [vmem:[%s3 + $0x320] sm:$0xff]
  %v780 = vld [vmem:[%s3 + $0x328] sm:$0xff]
  %v781 = vld [vmem:[%s3 + $0x330] sm:$0xff]
  %v782 = vld [vmem:[%s3 + $0x338] sm:$0xff]
  %v783 = vld [vmem:[%s3 + $0x340] sm:$0xff]
  %v784 = vld [vmem:[%s3 + $0x348] sm:$0xff]
  %v785 = vld [vmem:[%s3 + $0x350] sm:$0xff]
  %v786 = vld [vmem:[%s3 + $0x358] sm:$0xff]
  %v787 = vld [vmem:[%s3 + $0x360] sm:$0xff]
  %v788 = vld [vmem:[%s3 + $0x368] sm:$0xff]
  %v789 = vld [vmem:[%s3 + $0x370] sm:$0xff]
  %v790 = vld [vmem:[%s3 + $0x378] sm:$0xff]
  %v791 = vld [vmem:[%s3 + $0x380] sm:$0xff]
  %v792 = vld [vmem:[%s3 + $0x388] sm:$0xff]
  %v793 = vld [vmem:[%s3 + $0x390] sm:$0xff]
  %v794 = vld [vmem:[%s3 + $0x398] sm:$0xff]
  %v795 = vld [vmem:[%s3 + $0x3a0] sm:$0xff]
  %v796 = vld [vmem:[%s3 + $0x3a8] sm:$0xff]
  %v797 = vld [vmem:[%s3 + $0x3b0] sm:$0xff]
  %v798 = vld [vmem:[%s3 + $0x3b8] sm:$0xff]
  %v799 = vld [vmem:[%s3 + $0x3c0] sm:$0xff]
  %v800 = vld [vmem:[%s3 + $0x3c8] sm:$0xff]
  %v801 = vld [vmem:[%s3 + $0x3d0] sm:$0xff]
  %v802 = vld [vmem:[%s3 + $0x3d8] sm:$0xff]
  %v803 = vld [vmem:[%s3 + $0x3e0] sm:$0xff]
  %v804 = vld [vmem:[%s3 + $0x3e8] sm:$0xff]
  %v805 = vld [vmem:[%s3 + $0x3f0] sm:$0xff]
  %v806 = vld [vmem:[%s3 + $0x3f8] sm:$0xff]
  %v807 = vld [vmem:[%s2 + $0x2] sm:$0x1]
  %v808 = vlaneseq
  %v809 = vshrl.u32 %v808, 7
  %v810 = vsub.s32 0, %v809
  %v811 = vrot.slane %v807, %v810
  %812 = vmatprep.subr.mxu0 0.0
  %813 = vmatpush1.msra.mxu0 %v679
  %814 = vmatprep.subr.mxu0 0.0
  %815 = vmatpush1.msra.mxu0 %v680
  %816 = vmatprep.subr.mxu0 0.0
  %817 = vmatpush1.msra.mxu0 %v681
  %818 = vmatprep.subr.mxu0 0.0
  %819 = vmatpush1.msra.mxu0 %v682
  %820 = vmatprep.subr.mxu0 0.0
  %821 = vmatpush1.msra.mxu0 %v683
  %822 = vmatprep.subr.mxu0 0.0
  %823 = vmatpush1.msra.mxu0 %v684
  %824 = vmatprep.subr.mxu0 0.0
  %825 = vmatpush1.msra.mxu0 %v685
  %826 = vmatprep.subr.mxu0 0.0
  %827 = vmatpush1.msra.mxu0 %v686
  %828 = vmatprep.subr.mxu0 0.0
  %829 = vmatpush1.msra.mxu0 %v687
  %830 = vmatprep.subr.mxu0 0.0
  %831 = vmatpush1.msra.mxu0 %v688
  %832 = vmatprep.subr.mxu0 0.0
  %833 = vmatpush1.msra.mxu0 %v689
  %834 = vmatprep.subr.mxu0 0.0
  %835 = vmatpush1.msra.mxu0 %v690
  %836 = vmatprep.subr.mxu0 0.0
  %837 = vmatpush1.msra.mxu0 %v691
  %838 = vmatprep.subr.mxu0 0.0
  %839 = vmatpush1.msra.mxu0 %v692
  %840 = vmatprep.subr.mxu0 0.0
  %841 = vmatpush1.msra.mxu0 %v693
  %842 = vmatprep.subr.mxu0 0.0
  %843 = vmatpush1.msra.mxu0 %v694
  %844 = vmatprep.subr.mxu0 0.0
  %845 = vmatpush1.msra.mxu0 %v695
  %846 = vmatprep.subr.mxu0 0.0
  %847 = vmatpush1.msra.mxu0 %v696
  %848 = vmatprep.subr.mxu0 0.0
  %849 = vmatpush1.msra.mxu0 %v697
  %850 = vmatprep.subr.mxu0 0.0
  %851 = vmatpush1.msra.mxu0 %v698
  %852 = vmatprep.subr.mxu0 0.0
  %853 = vmatpush1.msra.mxu0 %v699
  %854 = vmatprep.subr.mxu0 0.0
  %855 = vmatpush1.msra.mxu0 %v700
  %856 = vmatprep.subr.mxu0 0.0
  %857 = vmatpush1.msra.mxu0 %v701
  %858 = vmatprep.subr.mxu0 0.0
  %859 = vmatpush1.msra.mxu0 %v702
  %860 = vmatprep.subr.mxu0 0.0
  %861 = vmatpush1.msra.mxu0 %v703
  %862 = vmatprep.subr.mxu0 0.0
  %863 = vmatpush1.msra.mxu0 %v704
  %864 = vmatprep.subr.mxu0 0.0
  %865 = vmatpush1.msra.mxu0 %v705
  %866 = vmatprep.subr.mxu0 0.0
  %867 = vmatpush1.msra.mxu0 %v706
  %868 = vmatprep.subr.mxu0 0.0
  %869 = vmatpush1.msra.mxu0 %v707
  %870 = vmatprep.subr.mxu0 0.0
  %871 = vmatpush1.msra.mxu0 %v708
  %872 = vmatprep.subr.mxu0 0.0
  %873 = vmatpush1.msra.mxu0 %v709
  %874 = vmatprep.subr.mxu0 0.0
  %875 = vmatpush1.msra.mxu0 %v710
  %876 = vmatprep.mubr.f32.mxu0 %v672
  %877 = vmatmul.mubr.f32.gmra.mrb[0].mxu0 %v671
  %v878 = vpop.f32.mrb[0].mxu0
  %v879 = vadd.f32 %v811, %v878
  %v880 = vpop.f32.mrb[0].mxu0
  %881 = vdwg.mxu0
  %882 = vmatprep.subr.mxu0 0.0
  %883 = vmatpush1.msra.mxu0 %v711
  %884 = vmatprep.subr.mxu0 0.0
  %885 = vmatpush1.msra.mxu0 %v712
  %886 = vmatprep.subr.mxu0 0.0
  %887 = vmatpush1.msra.mxu0 %v713
  %888 = vmatprep.subr.mxu0 0.0
  %889 = vmatpush1.msra.mxu0 %v714
  %890 = vmatprep.subr.mxu0 0.0
  %891 = vmatpush1.msra.mxu0 %v715
  %892 = vmatprep.subr.mxu0 0.0
  %893 = vmatpush1.msra.mxu0 %v716
  %894 = vmatprep.subr.mxu0 0.0
  %895 = vmatpush1.msra.mxu0 %v717
  %896 = vmatprep.subr.mxu0 0.0
  %897 = vmatpush1.msra.mxu0 %v718
  %898 = vmatprep.subr.mxu0 0.0
  %899 = vmatpush1.msra.mxu0 %v719
  %900 = vmatprep.subr.mxu0 0.0
  %901 = vmatpush1.msra.mxu0 %v720
  %902 = vmatprep.subr.mxu0 0.0
  %903 = vmatpush1.msra.mxu0 %v721
  %904 = vmatprep.subr.mxu0 0.0
  %905 = vmatpush1.msra.mxu0 %v722
  %906 = vmatprep.subr.mxu0 0.0
  %907 = vmatpush1.msra.mxu0 %v723
  %908 = vmatprep.subr.mxu0 0.0
  %909 = vmatpush1.msra.mxu0 %v724
  %910 = vmatprep.subr.mxu0 0.0
  %911 = vmatpush1.msra.mxu0 %v725
  %912 = vmatprep.subr.mxu0 0.0
  %913 = vmatpush1.msra.mxu0 %v726
  %914 = vmatprep.subr.mxu0 0.0
  %915 = vmatpush1.msra.mxu0 %v727
  %916 = vmatprep.subr.mxu0 0.0
  %917 = vmatpush1.msra.mxu0 %v728
  %918 = vmatprep.subr.mxu0 0.0
  %919 = vmatpush1.msra.mxu0 %v729
  %920 = vmatprep.subr.mxu0 0.0
  %921 = vmatpush1.msra.mxu0 %v730
  %922 = vmatprep.subr.mxu0 0.0
  %923 = vmatpush1.msra.mxu0 %v731
  %924 = vmatprep.subr.mxu0 0.0
  %925 = vmatpush1.msra.mxu0 %v732
  %926 = vmatprep.subr.mxu0 0.0
  %927 = vmatpush1.msra.mxu0 %v733
  %928 = vmatprep.subr.mxu0 0.0
  %929 = vmatpush1.msra.mxu0 %v734
  %930 = vmatprep.subr.mxu0 0.0
  %931 = vmatpush1.msra.mxu0 %v735
  %932 = vmatprep.subr.mxu0 0.0
  %933 = vmatpush1.msra.mxu0 %v736
  %934 = vmatprep.subr.mxu0 0.0
  %935 = vmatpush1.msra.mxu0 %v737
  %936 = vmatprep.subr.mxu0 0.0
  %937 = vmatpush1.msra.mxu0 %v738
  %938 = vmatprep.subr.mxu0 0.0
  %939 = vmatpush1.msra.mxu0 %v739
  %940 = vmatprep.subr.mxu0 0.0
  %941 = vmatpush1.msra.mxu0 %v740
  %942 = vmatprep.subr.mxu0 0.0
  %943 = vmatpush1.msra.mxu0 %v741
  %944 = vmatprep.subr.mxu0 0.0
  %945 = vmatpush1.msra.mxu0 %v742
  %946 = vmatprep.mubr.f32.mxu0 %v674
  %947 = vmatmul.mubr.f32.gmra.mrb[0].mxu0 %v673
  %v948 = vpop.f32.mrb[0].mxu0
  %v949 = vadd.f32 %v879, %v948
  %v950 = vpop.f32.mrb[0].mxu0
  %951 = vdwg.mxu0
  %952 = vmatprep.subr.mxu0 0.0
  %953 = vmatpush1.msra.mxu0 %v743
  %954 = vmatprep.subr.mxu0 0.0
  %955 = vmatpush1.msra.mxu0 %v744
  %956 = vmatprep.subr.mxu0 0.0
  %957 = vmatpush1.msra.mxu0 %v745
  %958 = vmatprep.subr.mxu0 0.0
  %959 = vmatpush1.msra.mxu0 %v746
  %960 = vmatprep.subr.mxu0 0.0
  %961 = vmatpush1.msra.mxu0 %v747
  %962 = vmatprep.subr.mxu0 0.0
  %963 = vmatpush1.msra.mxu0 %v748
  %964 = vmatprep.subr.mxu0 0.0
  %965 = vmatpush1.msra.mxu0 %v749
  %966 = vmatprep.subr.mxu0 0.0
  %967 = vmatpush1.msra.mxu0 %v750
  %968 = vmatprep.subr.mxu0 0.0
  %969 = vmatpush1.msra.mxu0 %v751
  %970 = vmatprep.subr.mxu0 0.0
  %971 = vmatpush1.msra.mxu0 %v752
  %972 = vmatprep.subr.mxu0 0.0
  %973 = vmatpush1.msra.mxu0 %v753
  %974 = vmatprep.subr.mxu0 0.0
  %975 = vmatpush1.msra.mxu0 %v754
  %976 = vmatprep.subr.mxu0 0.0
  %977 = vmatpush1.msra.mxu0 %v755
  %978 = vmatprep.subr.mxu0 0.0
  %979 = vmatpush1.msra.mxu0 %v756
  %980 = vmatprep.subr.mxu0 0.0
  %981 = vmatpush1.msra.mxu0 %v757
  %982 = vmatprep.subr.mxu0 0.0
  %983 = vmatpush1.msra.mxu0 %v758
  %984 = vmatprep.subr.mxu0 0.0
  %985 = vmatpush1.msra.mxu0 %v759
  %986 = vmatprep.subr.mxu0 0.0
  %987 = vmatpush1.msra.mxu0 %v760
  %988 = vmatprep.subr.mxu0 0.0
  %989 = vmatpush1.msra.mxu0 %v761
  %990 = vmatprep.subr.mxu0 0.0
  %991 = vmatpush1.msra.mxu0 %v762
  %992 = vmatprep.subr.mxu0 0.0
  %993 = vmatpush1.msra.mxu0 %v763
  %994 = vmatprep.subr.mxu0 0.0
  %995 = vmatpush1.msra.mxu0 %v764
  %996 = vmatprep.subr.mxu0 0.0
  %997 = vmatpush1.msra.mxu0 %v765
  %998 = vmatprep.subr.mxu0 0.0
  %999 = vmatpush1.msra.mxu0 %v766
  %1000 = vmatprep.subr.mxu0 0.0
  %1001 = vmatpush1.msra.mxu0 %v767
  %1002 = vmatprep.subr.mxu0 0.0
  %1003 = vmatpush1.msra.mxu0 %v768
  %1004 = vmatprep.subr.mxu0 0.0
  %1005 = vmatpush1.msra.mxu0 %v769
  %1006 = vmatprep.subr.mxu0 0.0
  %1007 = vmatpush1.msra.mxu0 %v770
  %1008 = vmatprep.subr.mxu0 0.0
  %1009 = vmatpush1.msra.mxu0 %v771
  %1010 = vmatprep.subr.mxu0 0.0
  %1011 = vmatpush1.msra.mxu0 %v772
  %1012 = vmatprep.subr.mxu0 0.0
  %1013 = vmatpush1.msra.mxu0 %v773
  %1014 = vmatprep.subr.mxu0 0.0
  %1015 = vmatpush1.msra.mxu0 %v774
  %1016 = vmatprep.mubr.f32.mxu0 %v676
  %1017 = vmatmul.mubr.f32.gmra.mrb[0].mxu0 %v675
  %v1018 = vpop.f32.mrb[0].mxu0
  %v1019 = vadd.f32 %v949, %v1018
  %v1020 = vpop.f32.mrb[0].mxu0
  %1021 = vdwg.mxu0
  %1022 = vmatprep.subr.mxu0 0.0
  %1023 = vmatpush1.msra.mxu0 %v775
  %1024 = vmatprep.subr.mxu0 0.0
  %1025 = vmatpush1.msra.mxu0 %v776
  %1026 = vmatprep.subr.mxu0 0.0
  %1027 = vmatpush1.msra.mxu0 %v777
  %1028 = vmatprep.subr.mxu0 0.0
  %1029 = vmatpush1.msra.mxu0 %v778
  %1030 = vmatprep.subr.mxu0 0.0
  %1031 = vmatpush1.msra.mxu0 %v779
  %1032 = vmatprep.subr.mxu0 0.0
  %1033 = vmatpush1.msra.mxu0 %v780
  %1034 = vmatprep.subr.mxu0 0.0
  %1035 = vmatpush1.msra.mxu0 %v781
  %1036 = vmatprep.subr.mxu0 0.0
  %1037 = vmatpush1.msra.mxu0 %v782
  %1038 = vmatprep.subr.mxu0 0.0
  %1039 = vmatpush1.msra.mxu0 %v783
  %1040 = vmatprep.subr.mxu0 0.0
  %1041 = vmatpush1.msra.mxu0 %v784
  %1042 = vmatprep.subr.mxu0 0.0
  %1043 = vmatpush1.msra.mxu0 %v785
  %1044 = vmatprep.subr.mxu0 0.0
  %1045 = vmatpush1.msra.mxu0 %v786
  %1046 = vmatprep.subr.mxu0 0.0
  %1047 = vmatpush1.msra.mxu0 %v787
  %1048 = vmatprep.subr.mxu0 0.0
  %1049 = vmatpush1.msra.mxu0 %v788
  %1050 = vmatprep.subr.mxu0 0.0
  %1051 = vmatpush1.msra.mxu0 %v789
  %1052 = vmatprep.subr.mxu0 0.0
  %1053 = vmatpush1.msra.mxu0 %v790
  %1054 = vmatprep.subr.mxu0 0.0
  %1055 = vmatpush1.msra.mxu0 %v791
  %1056 = vmatprep.subr.mxu0 0.0
  %1057 = vmatpush1.msra.mxu0 %v792
  %1058 = vmatprep.subr.mxu0 0.0
  %1059 = vmatpush1.msra.mxu0 %v793
  %1060 = vmatprep.subr.mxu0 0.0
  %1061 = vmatpush1.msra.mxu0 %v794
  %1062 = vmatprep.subr.mxu0 0.0
  %1063 = vmatpush1.msra.mxu0 %v795
  %1064 = vmatprep.subr.mxu0 0.0
  %1065 = vmatpush1.msra.mxu0 %v796
  %1066 = vmatprep.subr.mxu0 0.0
  %1067 = vmatpush1.msra.mxu0 %v797
  %1068 = vmatprep.subr.mxu0 0.0
  %1069 = vmatpush1.msra.mxu0 %v798
  %1070 = vmatprep.subr.mxu0 0.0
  %1071 = vmatpush1.msra.mxu0 %v799
  %1072 = vmatprep.subr.mxu0 0.0
  %1073 = vmatpush1.msra.mxu0 %v800
  %1074 = vmatprep.subr.mxu0 0.0
  %1075 = vmatpush1.msra.mxu0 %v801
  %1076 = vmatprep.subr.mxu0 0.0
  %1077 = vmatpush1.msra.mxu0 %v802
  %1078 = vmatprep.subr.mxu0 0.0
  %1079 = vmatpush1.msra.mxu0 %v803
  %1080 = vmatprep.subr.mxu0 0.0
  %1081 = vmatpush1.msra.mxu0 %v804
  %1082 = vmatprep.subr.mxu0 0.0
  %1083 = vmatpush1.msra.mxu0 %v805
  %1084 = vmatprep.subr.mxu0 0.0
  %1085 = vmatpush1.msra.mxu0 %v806
  %1086 = vmatprep.mubr.f32.mxu0 %v678
  %1087 = vmatmul.mubr.f32.gmra.mrb[0].mxu0 %v677
  %v1088 = vpop.f32.mrb[0].mxu0
  %v1089 = vadd.f32 %v1019, %v1088
  %v1090 = vpop.f32.mrb[0].mxu0
  %1091 = vdwg.mxu0
  %s1092 = scalar_lea.vmem %s3, 1024
  %v1093 = vld [vmem:[%s1092] sm:$0xff]
  %v1094 = vld [vmem:[%s1092 + $0x8] sm:$0xff]
  %v1095 = vld [vmem:[%s1092 + $0x10] sm:$0xff]
  %v1096 = vld [vmem:[%s1092 + $0x18] sm:$0xff]
  %v1097 = vld [vmem:[%s1092 + $0x20] sm:$0xff]
  %v1098 = vld [vmem:[%s1092 + $0x28] sm:$0xff]
  %v1099 = vld [vmem:[%s1092 + $0x30] sm:$0xff]
  %v1100 = vld [vmem:[%s1092 + $0x38] sm:$0xff]
  %v1101 = vld [vmem:[%s1092 + $0x40] sm:$0xff]
  %v1102 = vld [vmem:[%s1092 + $0x48] sm:$0xff]
  %v1103 = vld [vmem:[%s1092 + $0x50] sm:$0xff]
  %v1104 = vld [vmem:[%s1092 + $0x58] sm:$0xff]
  %v1105 = vld [vmem:[%s1092 + $0x60] sm:$0xff]
  %v1106 = vld [vmem:[%s1092 + $0x68] sm:$0xff]
  %v1107 = vld [vmem:[%s1092 + $0x70] sm:$0xff]
  %v1108 = vld [vmem:[%s1092 + $0x78] sm:$0xff]
  %v1109 = vld [vmem:[%s1092 + $0x80] sm:$0xff]
  %v1110 = vld [vmem:[%s1092 + $0x88] sm:$0xff]
  %v1111 = vld [vmem:[%s1092 + $0x90] sm:$0xff]
  %v1112 = vld [vmem:[%s1092 + $0x98] sm:$0xff]
  %v1113 = vld [vmem:[%s1092 + $0xa0] sm:$0xff]
  %v1114 = vld [vmem:[%s1092 + $0xa8] sm:$0xff]
  %v1115 = vld [vmem:[%s1092 + $0xb0] sm:$0xff]
  %v1116 = vld [vmem:[%s1092 + $0xb8] sm:$0xff]
  %v1117 = vld [vmem:[%s1092 + $0xc0] sm:$0xff]
  %v1118 = vld [vmem:[%s1092 + $0xc8] sm:$0xff]
  %v1119 = vld [vmem:[%s1092 + $0xd0] sm:$0xff]
  %v1120 = vld [vmem:[%s1092 + $0xd8] sm:$0xff]
  %v1121 = vld [vmem:[%s1092 + $0xe0] sm:$0xff]
  %v1122 = vld [vmem:[%s1092 + $0xe8] sm:$0xff]
  %v1123 = vld [vmem:[%s1092 + $0xf0] sm:$0xff]
  %v1124 = vld [vmem:[%s1092 + $0xf8] sm:$0xff]
  %v1125 = vld [vmem:[%s1092 + $0x100] sm:$0xff]
  %v1126 = vld [vmem:[%s1092 + $0x108] sm:$0xff]
  %v1127 = vld [vmem:[%s1092 + $0x110] sm:$0xff]
  %v1128 = vld [vmem:[%s1092 + $0x118] sm:$0xff]
  %v1129 = vld [vmem:[%s1092 + $0x120] sm:$0xff]
  %v1130 = vld [vmem:[%s1092 + $0x128] sm:$0xff]
  %v1131 = vld [vmem:[%s1092 + $0x130] sm:$0xff]
  %v1132 = vld [vmem:[%s1092 + $0x138] sm:$0xff]
  %v1133 = vld [vmem:[%s1092 + $0x140] sm:$0xff]
  %v1134 = vld [vmem:[%s1092 + $0x148] sm:$0xff]
  %v1135 = vld [vmem:[%s1092 + $0x150] sm:$0xff]
  %v1136 = vld [vmem:[%s1092 + $0x158] sm:$0xff]
  %v1137 = vld [vmem:[%s1092 + $0x160] sm:$0xff]
  %v1138 = vld [vmem:[%s1092 + $0x168] sm:$0xff]
  %v1139 = vld [vmem:[%s1092 + $0x170] sm:$0xff]
  %v1140 = vld [vmem:[%s1092 + $0x178] sm:$0xff]
  %v1141 = vld [vmem:[%s1092 + $0x180] sm:$0xff]
  %v1142 = vld [vmem:[%s1092 + $0x188] sm:$0xff]
  %v1143 = vld [vmem:[%s1092 + $0x190] sm:$0xff]
  %v1144 = vld [vmem:[%s1092 + $0x198] sm:$0xff]
  %v1145 = vld [vmem:[%s1092 + $0x1a0] sm:$0xff]
  %v1146 = vld [vmem:[%s1092 + $0x1a8] sm:$0xff]
  %v1147 = vld [vmem:[%s1092 + $0x1b0] sm:$0xff]
  %v1148 = vld [vmem:[%s1092 + $0x1b8] sm:$0xff]
  %v1149 = vld [vmem:[%s1092 + $0x1c0] sm:$0xff]
  %v1150 = vld [vmem:[%s1092 + $0x1c8] sm:$0xff]
  %v1151 = vld [vmem:[%s1092 + $0x1d0] sm:$0xff]
  %v1152 = vld [vmem:[%s1092 + $0x1d8] sm:$0xff]
  %v1153 = vld [vmem:[%s1092 + $0x1e0] sm:$0xff]
  %v1154 = vld [vmem:[%s1092 + $0x1e8] sm:$0xff]
  %v1155 = vld [vmem:[%s1092 + $0x1f0] sm:$0xff]
  %v1156 = vld [vmem:[%s1092 + $0x1f8] sm:$0xff]
  %v1157 = vld [vmem:[%s1092 + $0x200] sm:$0xff]
  %v1158 = vld [vmem:[%s1092 + $0x208] sm:$0xff]
  %v1159 = vld [vmem:[%s1092 + $0x210] sm:$0xff]
  %v1160 = vld [vmem:[%s1092 + $0x218] sm:$0xff]
  %v1161 = vld [vmem:[%s1092 + $0x220] sm:$0xff]
  %v1162 = vld [vmem:[%s1092 + $0x228] sm:$0xff]
  %v1163 = vld [vmem:[%s1092 + $0x230] sm:$0xff]
  %v1164 = vld [vmem:[%s1092 + $0x238] sm:$0xff]
  %v1165 = vld [vmem:[%s1092 + $0x240] sm:$0xff]
  %v1166 = vld [vmem:[%s1092 + $0x248] sm:$0xff]
  %v1167 = vld [vmem:[%s1092 + $0x250] sm:$0xff]
  %v1168 = vld [vmem:[%s1092 + $0x258] sm:$0xff]
  %v1169 = vld [vmem:[%s1092 + $0x260] sm:$0xff]
  %v1170 = vld [vmem:[%s1092 + $0x268] sm:$0xff]
  %v1171 = vld [vmem:[%s1092 + $0x270] sm:$0xff]
  %v1172 = vld [vmem:[%s1092 + $0x278] sm:$0xff]
  %v1173 = vld [vmem:[%s1092 + $0x280] sm:$0xff]
  %v1174 = vld [vmem:[%s1092 + $0x288] sm:$0xff]
  %v1175 = vld [vmem:[%s1092 + $0x290] sm:$0xff]
  %v1176 = vld [vmem:[%s1092 + $0x298] sm:$0xff]
  %v1177 = vld [vmem:[%s1092 + $0x2a0] sm:$0xff]
  %v1178 = vld [vmem:[%s1092 + $0x2a8] sm:$0xff]
  %v1179 = vld [vmem:[%s1092 + $0x2b0] sm:$0xff]
  %v1180 = vld [vmem:[%s1092 + $0x2b8] sm:$0xff]
  %v1181 = vld [vmem:[%s1092 + $0x2c0] sm:$0xff]
  %v1182 = vld [vmem:[%s1092 + $0x2c8] sm:$0xff]
  %v1183 = vld [vmem:[%s1092 + $0x2d0] sm:$0xff]
  %v1184 = vld [vmem:[%s1092 + $0x2d8] sm:$0xff]
  %v1185 = vld [vmem:[%s1092 + $0x2e0] sm:$0xff]
  %v1186 = vld [vmem:[%s1092 + $0x2e8] sm:$0xff]
  %v1187 = vld [vmem:[%s1092 + $0x2f0] sm:$0xff]
  %v1188 = vld [vmem:[%s1092 + $0x2f8] sm:$0xff]
  %v1189 = vld [vmem:[%s1092 + $0x300] sm:$0xff]
  %v1190 = vld [vmem:[%s1092 + $0x308] sm:$0xff]
  %v1191 = vld [vmem:[%s1092 + $0x310] sm:$0xff]
  %v1192 = vld [vmem:[%s1092 + $0x318] sm:$0xff]
  %v1193 = vld [vmem:[%s1092 + $0x320] sm:$0xff]
  %v1194 = vld [vmem:[%s1092 + $0x328] sm:$0xff]
  %v1195 = vld [vmem:[%s1092 + $0x330] sm:$0xff]
  %v1196 = vld [vmem:[%s1092 + $0x338] sm:$0xff]
  %v1197 = vld [vmem:[%s1092 + $0x340] sm:$0xff]
  %v1198 = vld [vmem:[%s1092 + $0x348] sm:$0xff]
  %v1199 = vld [vmem:[%s1092 + $0x350] sm:$0xff]
  %v1200 = vld [vmem:[%s1092 + $0x358] sm:$0xff]
  %v1201 = vld [vmem:[%s1092 + $0x360] sm:$0xff]
  %v1202 = vld [vmem:[%s1092 + $0x368] sm:$0xff]
  %v1203 = vld [vmem:[%s1092 + $0x370] sm:$0xff]
  %v1204 = vld [vmem:[%s1092 + $0x378] sm:$0xff]
  %v1205 = vld [vmem:[%s1092 + $0x380] sm:$0xff]
  %v1206 = vld [vmem:[%s1092 + $0x388] sm:$0xff]
  %v1207 = vld [vmem:[%s1092 + $0x390] sm:$0xff]
  %v1208 = vld [vmem:[%s1092 + $0x398] sm:$0xff]
  %v1209 = vld [vmem:[%s1092 + $0x3a0] sm:$0xff]
  %v1210 = vld [vmem:[%s1092 + $0x3a8] sm:$0xff]
  %v1211 = vld [vmem:[%s1092 + $0x3b0] sm:$0xff]
  %v1212 = vld [vmem:[%s1092 + $0x3b8] sm:$0xff]
  %v1213 = vld [vmem:[%s1092 + $0x3c0] sm:$0xff]
  %v1214 = vld [vmem:[%s1092 + $0x3c8] sm:$0xff]
  %v1215 = vld [vmem:[%s1092 + $0x3d0] sm:$0xff]
  %v1216 = vld [vmem:[%s1092 + $0x3d8] sm:$0xff]
  %v1217 = vld [vmem:[%s1092 + $0x3e0] sm:$0xff]
  %v1218 = vld [vmem:[%s1092 + $0x3e8] sm:$0xff]
  %v1219 = vld [vmem:[%s1092 + $0x3f0] sm:$0xff]
  %v1220 = vld [vmem:[%s1092 + $0x3f8] sm:$0xff]
  %v1221 = vld [vmem:[%s2 + $0x3] sm:$0x1]
  %v1222 = vlaneseq
  %v1223 = vshrl.u32 %v1222, 7
  %v1224 = vsub.s32 0, %v1223
  %v1225 = vrot.slane %v1221, %v1224
  %1226 = vmatprep.subr.mxu0 0.0
  %1227 = vmatpush1.msra.mxu0 %v1093
  %1228 = vmatprep.subr.mxu0 0.0
  %1229 = vmatpush1.msra.mxu0 %v1094
  %1230 = vmatprep.subr.mxu0 0.0
  %1231 = vmatpush1.msra.mxu0 %v1095
  %1232 = vmatprep.subr.mxu0 0.0
  %1233 = vmatpush1.msra.mxu0 %v1096
  %1234 = vmatprep.subr.mxu0 0.0
  %1235 = vmatpush1.msra.mxu0 %v1097
  %1236 = vmatprep.subr.mxu0 0.0
  %1237 = vmatpush1.msra.mxu0 %v1098
  %1238 = vmatprep.subr.mxu0 0.0
  %1239 = vmatpush1.msra.mxu0 %v1099
  %1240 = vmatprep.subr.mxu0 0.0
  %1241 = vmatpush1.msra.mxu0 %v1100
  %1242 = vmatprep.subr.mxu0 0.0
  %1243 = vmatpush1.msra.mxu0 %v1101
  %1244 = vmatprep.subr.mxu0 0.0
  %1245 = vmatpush1.msra.mxu0 %v1102
  %1246 = vmatprep.subr.mxu0 0.0
  %1247 = vmatpush1.msra.mxu0 %v1103
  %1248 = vmatprep.subr.mxu0 0.0
  %1249 = vmatpush1.msra.mxu0 %v1104
  %1250 = vmatprep.subr.mxu0 0.0
  %1251 = vmatpush1.msra.mxu0 %v1105
  %1252 = vmatprep.subr.mxu0 0.0
  %1253 = vmatpush1.msra.mxu0 %v1106
  %1254 = vmatprep.subr.mxu0 0.0
  %1255 = vmatpush1.msra.mxu0 %v1107
  %1256 = vmatprep.subr.mxu0 0.0
  %1257 = vmatpush1.msra.mxu0 %v1108
  %1258 = vmatprep.subr.mxu0 0.0
  %1259 = vmatpush1.msra.mxu0 %v1109
  %1260 = vmatprep.subr.mxu0 0.0
  %1261 = vmatpush1.msra.mxu0 %v1110
  %1262 = vmatprep.subr.mxu0 0.0
  %1263 = vmatpush1.msra.mxu0 %v1111
  %1264 = vmatprep.subr.mxu0 0.0
  %1265 = vmatpush1.msra.mxu0 %v1112
  %1266 = vmatprep.subr.mxu0 0.0
  %1267 = vmatpush1.msra.mxu0 %v1113
  %1268 = vmatprep.subr.mxu0 0.0
  %1269 = vmatpush1.msra.mxu0 %v1114
  %1270 = vmatprep.subr.mxu0 0.0
  %1271 = vmatpush1.msra.mxu0 %v1115
  %1272 = vmatprep.subr.mxu0 0.0
  %1273 = vmatpush1.msra.mxu0 %v1116
  %1274 = vmatprep.subr.mxu0 0.0
  %1275 = vmatpush1.msra.mxu0 %v1117
  %1276 = vmatprep.subr.mxu0 0.0
  %1277 = vmatpush1.msra.mxu0 %v1118
  %1278 = vmatprep.subr.mxu0 0.0
  %1279 = vmatpush1.msra.mxu0 %v1119
  %1280 = vmatprep.subr.mxu0 0.0
  %1281 = vmatpush1.msra.mxu0 %v1120
  %1282 = vmatprep.subr.mxu0 0.0
  %1283 = vmatpush1.msra.mxu0 %v1121
  %1284 = vmatprep.subr.mxu0 0.0
  %1285 = vmatpush1.msra.mxu0 %v1122
  %1286 = vmatprep.subr.mxu0 0.0
  %1287 = vmatpush1.msra.mxu0 %v1123
  %1288 = vmatprep.subr.mxu0 0.0
  %1289 = vmatpush1.msra.mxu0 %v1124
  %1290 = vmatprep.mubr.f32.mxu0 %v672
  %1291 = vmatmul.mubr.f32.gmra.mrb[0].mxu0 %v671
  %v1292 = vpop.f32.mrb[0].mxu0
  %v1293 = vadd.f32 %v1225, %v1292
  %v1294 = vpop.f32.mrb[0].mxu0
  %1295 = vdwg.mxu0
  %1296 = vmatprep.subr.mxu0 0.0
  %1297 = vmatpush1.msra.mxu0 %v1125
  %1298 = vmatprep.subr.mxu0 0.0
  %1299 = vmatpush1.msra.mxu0 %v1126
  %1300 = vmatprep.subr.mxu0 0.0
  %1301 = vmatpush1.msra.mxu0 %v1127
  %1302 = vmatprep.subr.mxu0 0.0
  %1303 = vmatpush1.msra.mxu0 %v1128
  %1304 = vmatprep.subr.mxu0 0.0
  %1305 = vmatpush1.msra.mxu0 %v1129
  %1306 = vmatprep.subr.mxu0 0.0
  %1307 = vmatpush1.msra.mxu0 %v1130
  %1308 = vmatprep.subr.mxu0 0.0
  %1309 = vmatpush1.msra.mxu0 %v1131
  %1310 = vmatprep.subr.mxu0 0.0
  %1311 = vmatpush1.msra.mxu0 %v1132
  %1312 = vmatprep.subr.mxu0 0.0
  %1313 = vmatpush1.msra.mxu0 %v1133
  %1314 = vmatprep.subr.mxu0 0.0
  %1315 = vmatpush1.msra.mxu0 %v1134
  %1316 = vmatprep.subr.mxu0 0.0
  %1317 = vmatpush1.msra.mxu0 %v1135
  %1318 = vmatprep.subr.mxu0 0.0
  %1319 = vmatpush1.msra.mxu0 %v1136
  %1320 = vmatprep.subr.mxu0 0.0
  %1321 = vmatpush1.msra.mxu0 %v1137
  %1322 = vmatprep.subr.mxu0 0.0
  %1323 = vmatpush1.msra.mxu0 %v1138
  %1324 = vmatprep.subr.mxu0 0.0
  %1325 = vmatpush1.msra.mxu0 %v1139
  %1326 = vmatprep.subr.mxu0 0.0
  %1327 = vmatpush1.msra.mxu0 %v1140
  %1328 = vmatprep.subr.mxu0 0.0
  %1329 = vmatpush1.msra.mxu0 %v1141
  %1330 = vmatprep.subr.mxu0 0.0
  %1331 = vmatpush1.msra.mxu0 %v1142
  %1332 = vmatprep.subr.mxu0 0.0
  %1333 = vmatpush1.msra.mxu0 %v1143
  %1334 = vmatprep.subr.mxu0 0.0
  %1335 = vmatpush1.msra.mxu0 %v1144
  %1336 = vmatprep.subr.mxu0 0.0
  %1337 = vmatpush1.msra.mxu0 %v1145
  %1338 = vmatprep.subr.mxu0 0.0
  %1339 = vmatpush1.msra.mxu0 %v1146
  %1340 = vmatprep.subr.mxu0 0.0
  %1341 = vmatpush1.msra.mxu0 %v1147
  %1342 = vmatprep.subr.mxu0 0.0
  %1343 = vmatpush1.msra.mxu0 %v1148
  %1344 = vmatprep.subr.mxu0 0.0
  %1345 = vmatpush1.msra.mxu0 %v1149
  %1346 = vmatprep.subr.mxu0 0.0
  %1347 = vmatpush1.msra.mxu0 %v1150
  %1348 = vmatprep.subr.mxu0 0.0
  %1349 = vmatpush1.msra.mxu0 %v1151
  %1350 = vmatprep.subr.mxu0 0.0
  %1351 = vmatpush1.msra.mxu0 %v1152
  %1352 = vmatprep.subr.mxu0 0.0
  %1353 = vmatpush1.msra.mxu0 %v1153
  %1354 = vmatprep.subr.mxu0 0.0
  %1355 = vmatpush1.msra.mxu0 %v1154
  %1356 = vmatprep.subr.mxu0 0.0
  %1357 = vmatpush1.msra.mxu0 %v1155
  %1358 = vmatprep.subr.mxu0 0.0
  %1359 = vmatpush1.msra.mxu0 %v1156
  %1360 = vmatprep.mubr.f32.mxu0 %v674
  %1361 = vmatmul.mubr.f32.gmra.mrb[0].mxu0 %v673
  %v1362 = vpop.f32.mrb[0].mxu0
  %v1363 = vadd.f32 %v1293, %v1362
  %v1364 = vpop.f32.mrb[0].mxu0
  %1365 = vdwg.mxu0
  %1366 = vmatprep.subr.mxu0 0.0
  %1367 = vmatpush1.msra.mxu0 %v1157
  %1368 = vmatprep.subr.mxu0 0.0
  %1369 = vmatpush1.msra.mxu0 %v1158
  %1370 = vmatprep.subr.mxu0 0.0
  %1371 = vmatpush1.msra.mxu0 %v1159
  %1372 = vmatprep.subr.mxu0 0.0
  %1373 = vmatpush1.msra.mxu0 %v1160
  %1374 = vmatprep.subr.mxu0 0.0
  %1375 = vmatpush1.msra.mxu0 %v1161
  %1376 = vmatprep.subr.mxu0 0.0
  %1377 = vmatpush1.msra.mxu0 %v1162
  %1378 = vmatprep.subr.mxu0 0.0
  %1379 = vmatpush1.msra.mxu0 %v1163
  %1380 = vmatprep.subr.mxu0 0.0
  %1381 = vmatpush1.msra.mxu0 %v1164
  %1382 = vmatprep.subr.mxu0 0.0
  %1383 = vmatpush1.msra.mxu0 %v1165
  %1384 = vmatprep.subr.mxu0 0.0
  %1385 = vmatpush1.msra.mxu0 %v1166
  %1386 = vmatprep.subr.mxu0 0.0
  %1387 = vmatpush1.msra.mxu0 %v1167
  %1388 = vmatprep.subr.mxu0 0.0
  %1389 = vmatpush1.msra.mxu0 %v1168
  %1390 = vmatprep.subr.mxu0 0.0
  %1391 = vmatpush1.msra.mxu0 %v1169
  %1392 = vmatprep.subr.mxu0 0.0
  %1393 = vmatpush1.msra.mxu0 %v1170
  %1394 = vmatprep.subr.mxu0 0.0
  %1395 = vmatpush1.msra.mxu0 %v1171
  %1396 = vmatprep.subr.mxu0 0.0
  %1397 = vmatpush1.msra.mxu0 %v1172
  %1398 = vmatprep.subr.mxu0 0.0
  %1399 = vmatpush1.msra.mxu0 %v1173
  %1400 = vmatprep.subr.mxu0 0.0
  %1401 = vmatpush1.msra.mxu0 %v1174
  %1402 = vmatprep.subr.mxu0 0.0
  %1403 = vmatpush1.msra.mxu0 %v1175
  %1404 = vmatprep.subr.mxu0 0.0
  %1405 = vmatpush1.msra.mxu0 %v1176
  %1406 = vmatprep.subr.mxu0 0.0
  %1407 = vmatpush1.msra.mxu0 %v1177
  %1408 = vmatprep.subr.mxu0 0.0
  %1409 = vmatpush1.msra.mxu0 %v1178
  %1410 = vmatprep.subr.mxu0 0.0
  %1411 = vmatpush1.msra.mxu0 %v1179
  %1412 = vmatprep.subr.mxu0 0.0
  %1413 = vmatpush1.msra.mxu0 %v1180
  %1414 = vmatprep.subr.mxu0 0.0
  %1415 = vmatpush1.msra.mxu0 %v1181
  %1416 = vmatprep.subr.mxu0 0.0
  %1417 = vmatpush1.msra.mxu0 %v1182
  %1418 = vmatprep.subr.mxu0 0.0
  %1419 = vmatpush1.msra.mxu0 %v1183
  %1420 = vmatprep.subr.mxu0 0.0
  %1421 = vmatpush1.msra.mxu0 %v1184
  %1422 = vmatprep.subr.mxu0 0.0
  %1423 = vmatpush1.msra.mxu0 %v1185
  %1424 = vmatprep.subr.mxu0 0.0
  %1425 = vmatpush1.msra.mxu0 %v1186
  %1426 = vmatprep.subr.mxu0 0.0
  %1427 = vmatpush1.msra.mxu0 %v1187
  %1428 = vmatprep.subr.mxu0 0.0
  %1429 = vmatpush1.msra.mxu0 %v1188
  %1430 = vmatprep.mubr.f32.mxu0 %v676
  %1431 = vmatmul.mubr.f32.gmra.mrb[0].mxu0 %v675
  %v1432 = vpop.f32.mrb[0].mxu0
  %v1433 = vadd.f32 %v1363, %v1432
  %v1434 = vpop.f32.mrb[0].mxu0
  %1435 = vdwg.mxu0
  %1436 = vmatprep.subr.mxu0 0.0
  %1437 = vmatpush1.msra.mxu0 %v1189
  %1438 = vmatprep.subr.mxu0 0.0
  %1439 = vmatpush1.msra.mxu0 %v1190
  %1440 = vmatprep.subr.mxu0 0.0
  %1441 = vmatpush1.msra.mxu0 %v1191
  %1442 = vmatprep.subr.mxu0 0.0
  %1443 = vmatpush1.msra.mxu0 %v1192
  %1444 = vmatprep.subr.mxu0 0.0
  %1445 = vmatpush1.msra.mxu0 %v1193
  %1446 = vmatprep.subr.mxu0 0.0
  %1447 = vmatpush1.msra.mxu0 %v1194
  %1448 = vmatprep.subr.mxu0 0.0
  %1449 = vmatpush1.msra.mxu0 %v1195
  %1450 = vmatprep.subr.mxu0 0.0
  %1451 = vmatpush1.msra.mxu0 %v1196
  %1452 = vmatprep.subr.mxu0 0.0
  %1453 = vmatpush1.msra.mxu0 %v1197
  %1454 = vmatprep.subr.mxu0 0.0
  %1455 = vmatpush1.msra.mxu0 %v1198
  %1456 = vmatprep.subr.mxu0 0.0
  %1457 = vmatpush1.msra.mxu0 %v1199
  %1458 = vmatprep.subr.mxu0 0.0
  %1459 = vmatpush1.msra.mxu0 %v1200
  %1460 = vmatprep.subr.mxu0 0.0
  %1461 = vmatpush1.msra.mxu0 %v1201
  %1462 = vmatprep.subr.mxu0 0.0
  %1463 = vmatpush1.msra.mxu0 %v1202
  %1464 = vmatprep.subr.mxu0 0.0
  %1465 = vmatpush1.msra.mxu0 %v1203
  %1466 = vmatprep.subr.mxu0 0.0
  %1467 = vmatpush1.msra.mxu0 %v1204
  %1468 = vmatprep.subr.mxu0 0.0
  %1469 = vmatpush1.msra.mxu0 %v1205
  %1470 = vmatprep.subr.mxu0 0.0
  %1471 = vmatpush1.msra.mxu0 %v1206
  %1472 = vmatprep.subr.mxu0 0.0
  %1473 = vmatpush1.msra.mxu0 %v1207
  %1474 = vmatprep.subr.mxu0 0.0
  %1475 = vmatpush1.msra.mxu0 %v1208
  %1476 = vmatprep.subr.mxu0 0.0
  %1477 = vmatpush1.msra.mxu0 %v1209
  %1478 = vmatprep.subr.mxu0 0.0
  %1479 = vmatpush1.msra.mxu0 %v1210
  %1480 = vmatprep.subr.mxu0 0.0
  %1481 = vmatpush1.msra.mxu0 %v1211
  %1482 = vmatprep.subr.mxu0 0.0
  %1483 = vmatpush1.msra.mxu0 %v1212
  %1484 = vmatprep.subr.mxu0 0.0
  %1485 = vmatpush1.msra.mxu0 %v1213
  %1486 = vmatprep.subr.mxu0 0.0
  %1487 = vmatpush1.msra.mxu0 %v1214
  %1488 = vmatprep.subr.mxu0 0.0
  %1489 = vmatpush1.msra.mxu0 %v1215
  %1490 = vmatprep.subr.mxu0 0.0
  %1491 = vmatpush1.msra.mxu0 %v1216
  %1492 = vmatprep.subr.mxu0 0.0
  %1493 = vmatpush1.msra.mxu0 %v1217
  %1494 = vmatprep.subr.mxu0 0.0
  %1495 = vmatpush1.msra.mxu0 %v1218
  %1496 = vmatprep.subr.mxu0 0.0
  %1497 = vmatpush1.msra.mxu0 %v1219
  %1498 = vmatprep.subr.mxu0 0.0
  %1499 = vmatpush1.msra.mxu0 %v1220
  %1500 = vmatprep.mubr.f32.mxu0 %v678
  %1501 = vmatmul.mubr.f32.gmra.mrb[0].mxu0 %v677
  %v1502 = vpop.f32.mrb[0].mxu0
  %v1503 = vadd.f32 %v1433, %v1502
  %v1504 = vpop.f32.mrb[0].mxu0
  %1505 = vdwg.mxu0
  %v1506 = vld [vmem:[%s4] sm:$0xff]
  %v1507 = vmul.f32 %v1503, 0.5
  %v1508 = vmul.f32 %v1507, 1.442695
  %v1509 = vpow.pop %v1508
  %v1510 = vmul.f32 %v1506, %v1509
  %v1511 = vadd.f32 %v1510, %v1089
  %vm1512 = vcmask 15360
  %1513 = vst.msk [vmem:[%s5] sm:$0xff] %vm1512, %v1511
  %s1514 = scalar_lea.vmem %s5, 8
  %1515 = vst.msk [vmem:[%s1514] sm:$0xff] %vm1512, %v1089
  %s1516 = scalar_lea.vmem %s5, 16
  %1517 = vst.msk [vmem:[%s1516] sm:$0xff] %vm1512, %v1503
  // Predicated region
  $region22: #{tpu_custom_call.1} parent=0 // pred_check
    _
  $region23: #{tpu_custom_call.1} parent=0 // pred_check_branch
    %1519 = sbr.rel (0) target = $region25
  $region24: #{tpu_custom_call.1} parent=0 // pred_region
    _
  $region25: #{tpu_custom_call.1} parent=0 // pred_fallthru
    _
  // Predicated region
  $region26: #{tpu_custom_call.1} parent=0 // pred_check
    _
  $region27: #{tpu_custom_call.1} parent=0 // pred_check_branch
    %1521 = sbr.rel (0) target = $region29
  $region28: #{tpu_custom_call.1} parent=0 // pred_region
    _
  $region29: #{tpu_custom_call.1} parent=0 // pred_fallthru
    _

</llo_original>
